<compile_context>
chip_gen: v7x
topology: tpu7x:2x2x1
jax: 0.10.0
libtpu: 0.0.40
codegen_flags: <defaults>
</compile_context>

<pallas_src>
import functools

import jax
import jax.numpy as jnp
from jax.experimental import pallas as pl
from jax.experimental.pallas import tpu as pltpu


def _pick_tile(n, target, align):
    """Largest divisor of n that is a multiple of `align` and <= target, else n."""
    if n <= target:
        return n
    best = None
    t = align
    while t <= target:
        if n % t == 0:
            best = t
        t += align
    return best if best is not None else n


def _conv_kernel(x_src_ref, x_dst_ref, d_src_ref, d_dst_ref, m_dst_ref,
                 adj_ref, wrel_ref, wroot_ref, bias_ref,
                 h_ref, bsum_ref, bsq_ref, acc_ref,
                 *, num_heads, out_channels, neg_slope):
    """One (dst-tile, src-tile) step of the fused per-head pooled GraphConv.

    grid = (num_dst_tiles, num_src_tiles); the src axis is the reduction
    ("arbitrary"): acc_ref[h] accumulates adj_tile @ xs_h over src tiles; the
    weight matmuls, leaky_relu, scatter-mask and BN partial stats are emitted
    only at the last src tile via pl.when.  All heads are handled inside one
    step so the [TM, C] output store is lane-dense.
    """
    k = pl.program_id(1)
    nk = pl.num_programs(1)

    @pl.when(k == 0)
    def _init():
        acc_ref[...] = jnp.zeros_like(acc_ref)

    adj = adj_ref[...]                                   # [TM, TS], bf16 (or f32)
    x_src = x_src_ref[...]                               # [TS, C]   f32
    d_src = d_src_ref[...]                               # [TS, NH]  score*mask (f32)
    for h in range(num_heads):
        # pooled source features for head h; cast to the adjacency dtype so the
        # MXU runs at the bf16 rate on v6e/v7x, accumulate in f32.
        xs_h = (x_src * d_src[:, h:h + 1]).astype(adj.dtype)
        acc_ref[h] += jnp.dot(adj, xs_h, preferred_element_type=jnp.float32)

    @pl.when(k == nk - 1)
    def _finalize():
        x_dst = x_dst_ref[...]                           # [TM, C]
        d_dst = d_dst_ref[...]                           # [TM, NH]
        m_dst = m_dst_ref[...]                           # [TM, NH]
        oc = out_channels
        for h in range(num_heads):
            mh = m_dst[:, h:h + 1]                       # keep-mask at dst rows
            agg_h = acc_ref[h] * mh                      # drop edges into dropped dst
            xs_h = x_dst * d_dst[:, h:h + 1]             # pooled features (root term)
            # Weights are pre-transposed ([C, OC]) on the host: no in-kernel .T.
            o = (jnp.dot(agg_h, wrel_ref[h], preferred_element_type=jnp.float32)
                 + jnp.dot(xs_h, wroot_ref[h], preferred_element_type=jnp.float32)
                 + bias_ref[h])
            o = jnp.where(o >= 0, o, neg_slope * o) * mh  # leaky_relu + scatter mask
            h_ref[:, h * oc:(h + 1) * oc] = o             # head h -> its column slab
        hp = h_ref[...]                                   # [TM, C], heads concatenated
        bsum_ref[0] = jnp.sum(hp, axis=0, keepdims=True)  # BN partial sums
        bsq_ref[0] = jnp.sum(hp * hp, axis=0, keepdims=True)


def _bn_combine_kernel(h_ref, x_ref, mean_ref, rstd_ref, out_ref):
    """new_x = 0.5 * (x + batchnorm(h)); lane-dense [TM, C] tiles, no divides."""
    out_ref[...] = 0.5 * (x_ref[...] + (h_ref[...] - mean_ref[...]) * rstd_ref[...])


def multi_head_block_forward(x, edge_index, params, *, min_score=0.7,
                             tile_m=256, tile_s=512,
                             matmul_dtype=jnp.bfloat16):
    """x: [N, C] f32, edge_index: [2, E] int32 (row 0 = src, row 1 = dst)."""
    N, C = x.shape
    wpool = params["pool_w"]            # [NH, C]
    wroot = params["root_w"]            # [NH, OC, C]
    wrel = params["rel_w"]              # [NH, OC, C]
    bias = params["rel_b"]              # [NH, OC]
    NH, OC, _ = wroot.shape
    assert NH * OC == C, "num_heads * out_channels must equal in_channels"
    # NOTE: for full MXU/lane utilization, production shapes should have C a
    # multiple of 128 and N a multiple of 8 (small demo shapes still run).

    TM = _pick_tile(N, tile_m, 8)       # dst-node tile (sublane axis)
    TS = _pick_tile(N, tile_s, 128)     # src-node tile (lane axis of adj)
    num_i, num_k = N // TM, N // TS

    # Dense adjacency A[dst, src]; stored in bf16 (exact small integer counts).
    # TODO(synk): for E << N^2 graphs switch to a CSR / edge-list formulation
    # with scalar-prefetched row offsets instead of a dense adjacency.
    src, dst = edge_index[0], edge_index[1]
    adj = (jnp.zeros((N, N), jnp.float32).at[dst, src].add(1.0)
           ).astype(matmul_dtype)

    # TopKPooling (min_score mode): global softmax score per head, kept in f32
    # (this is a tiny O(N*C*NH) pre-pass; the Pallas kernel handles the
    # O(N^2*C*NH) aggregation).  d = score*mask is computed once and reused.
    s_raw = x @ wpool.T                                          # [N, NH]
    e = jnp.exp(s_raw - jnp.max(s_raw, axis=0, keepdims=True))
    score = e / jnp.sum(e, axis=0, keepdims=True)
    thr = jnp.minimum(jnp.max(score, axis=0, keepdims=True) - 1e-7, min_score)
    mask = (score > thr).astype(jnp.float32)                     # [N, NH]
    d = score * mask

    # Pre-transpose the GraphConv weights once: [NH, C, OC] (no in-kernel .T).
    wrel_t = jnp.transpose(wrel, (0, 2, 1))
    wroot_t = jnp.transpose(wroot, (0, 2, 1))
    bias3 = bias.reshape(NH, 1, OC)

    kernel = functools.partial(_conv_kernel, num_heads=NH, out_channels=OC,
                               neg_slope=0.01)

    cost = pl.CostEstimate(
        flops=int(2 * N * N * C * NH + 4 * N * C * OC * NH),
        transcendentals=0,
        bytes_accessed=int(N * N * jnp.dtype(matmul_dtype).itemsize
                           + (num_i + 2) * N * C * 4        # x (src sweeps + dst) + h_pre out
                           + num_i * 2 * C * 4              # BN partial stats
                           + 2 * NH * C * OC * 4))          # weights

    h_pre, bsum, bsq = pl.pallas_call(
        kernel,
        out_shape=(jax.ShapeDtypeStruct((N, C), jnp.float32),
                   jax.ShapeDtypeStruct((num_i, 1, C), jnp.float32),
                   jax.ShapeDtypeStruct((num_i, 1, C), jnp.float32)),
        grid_spec=pltpu.PrefetchScalarGridSpec(
            num_scalar_prefetch=0,
            grid=(num_i, num_k),
            in_specs=[
                pl.BlockSpec((TS, C), lambda i, k: (k, 0)),        # x, src rows
                pl.BlockSpec((TM, C), lambda i, k: (i, 0)),        # x, dst rows
                pl.BlockSpec((TS, NH), lambda i, k: (k, 0)),       # score*mask, src
                pl.BlockSpec((TM, NH), lambda i, k: (i, 0)),       # score*mask, dst
                pl.BlockSpec((TM, NH), lambda i, k: (i, 0)),       # keep-mask, dst
                pl.BlockSpec((TM, TS), lambda i, k: (i, k)),       # adjacency tile
                pl.BlockSpec((NH, C, OC), lambda i, k: (0, 0, 0)),  # lin_rel.weight^T
                pl.BlockSpec((NH, C, OC), lambda i, k: (0, 0, 0)),  # lin_root.weight^T
                pl.BlockSpec((NH, 1, OC), lambda i, k: (0, 0, 0)),  # lin_rel.bias
            ],
            out_specs=(
                pl.BlockSpec((TM, C), lambda i, k: (i, 0)),        # pre-BN head outputs
                pl.BlockSpec((1, 1, C), lambda i, k: (i, 0, 0)),   # per-tile sum(h)
                pl.BlockSpec((1, 1, C), lambda i, k: (i, 0, 0)),   # per-tile sum(h*h)
            ),
            scratch_shapes=[pltpu.VMEM((NH, TM, C), jnp.float32)],
        ),
        compiler_params=pltpu.CompilerParams(
            dimension_semantics=("parallel", "arbitrary"),
            vmem_limit_bytes=32 * 1024 * 1024),
        cost_estimate=cost,
    )(x, x, d, d, mask, adj, wrel_t, wroot_t, bias3)

    # Finish the BatchNorm batch stats (tiny [num_i, 1, C] reduction) and turn
    # them into mean / reciprocal-std so kernel 2 has no divides or sqrts.
    tot = jnp.sum(bsum, axis=(0, 1))                     # [C]
    totsq = jnp.sum(bsq, axis=(0, 1))                    # [C]
    mean = tot / N
    var = jnp.maximum(totsq / N - mean * mean, 0.0)
    rstd = jax.lax.rsqrt(var + 1e-5).reshape(1, C)
    mean = mean.reshape(1, C)

    new_x = pl.pallas_call(
        _bn_combine_kernel,
        out_shape=jax.ShapeDtypeStruct((N, C), jnp.float32),
        grid_spec=pltpu.PrefetchScalarGridSpec(
            num_scalar_prefetch=0,
            grid=(num_i,),
            in_specs=[
                pl.BlockSpec((TM, C), lambda i: (i, 0)),   # pre-BN head outputs
                pl.BlockSpec((TM, C), lambda i: (i, 0)),   # residual (= original x)
                pl.BlockSpec((1, C), lambda i: (0, 0)),    # BN mean
                pl.BlockSpec((1, C), lambda i: (0, 0)),    # BN 1/sqrt(var+eps)
            ],
            out_specs=pl.BlockSpec((TM, C), lambda i: (i, 0)),
        ),
        compiler_params=pltpu.CompilerParams(
            dimension_semantics=("parallel",)),
    )(h_pre, x, mean, rstd)
    return new_x


def _reference(x, edge_index, params, *, min_score=0.7):
    """Pure-JAX mirror of the forward pass, for correctness checking."""
    N, C = x.shape
    NH, OC, _ = params["root_w"].shape
    src, dst = edge_index[0], edge_index[1]
    adj = jnp.zeros((N, N), jnp.float32).at[dst, src].add(1.0)
    cols = []
    for h in range(NH):
        w = params["pool_w"][h]
        s_raw = x @ w
        e = jnp.exp(s_raw - jnp.max(s_raw))
        score = e / jnp.sum(e)
        thr = jnp.minimum(jnp.max(score) - 1e-7, min_score)
        mask = (score > thr).astype(jnp.float32)[:, None]
        xs = x * score[:, None] * mask
        agg = (adj @ xs) * mask
        hh = agg @ params["rel_w"][h].T + xs @ params["root_w"][h].T + params["rel_b"][h][None]
        hh = jnp.where(hh >= 0, hh, 0.01 * hh) * mask
        mean = jnp.mean(hh, axis=0, keepdims=True)
        var = jnp.mean((hh - mean) ** 2, axis=0, keepdims=True)
        bn = (hh - mean) / jnp.sqrt(var + 1e-5)
        cols.append(0.5 * (x[:, h * OC:(h + 1) * OC] + bn))
    return jnp.concatenate(cols, axis=-1)


def init_params(key, in_channels, out_channels, num_heads):
    kp, kr, kl, kb = jax.random.split(key, 4)
    scale = 1.0 / jnp.sqrt(jnp.float32(in_channels))
    return {
        # TopKPooling.weight (shape [1, in_channels] per head -> stacked)
        "pool_w": jax.random.normal(kp, (num_heads, in_channels), jnp.float32) * 0.5,
        # GraphConv.lin_root.weight / lin_rel.weight / lin_rel.bias
        "root_w": jax.random.normal(kr, (num_heads, out_channels, in_channels), jnp.float32) * scale,
        "rel_w": jax.random.normal(kl, (num_heads, out_channels, in_channels), jnp.float32) * scale,
        "rel_b": jax.random.normal(kb, (num_heads, out_channels), jnp.float32) * 0.1,
    }


if __name__ == "__main__":
    N = 16            # number of graph nodes
    C = 8             # in_channels
    NUM_HEADS = 2
    OC = C // NUM_HEADS  # out_channels (num_heads * out_channels == in_channels)

    key = jax.random.PRNGKey(0)
    kx, kp = jax.random.split(key)
    x = jax.random.normal(kx, (N, C), jnp.float32)

    # small deterministic graph: directed ring in both directions
    idx = jnp.arange(N, dtype=jnp.int32)
    src = jnp.concatenate([idx, (idx + 1) % N])
    dst = jnp.concatenate([(idx + 1) % N, idx])
    edge_index = jnp.stack([src, dst], axis=0)          # [2, 2N]

    params = init_params(kp, C, OC, NUM_HEADS)

    # (1) Tight check of the f32-matmul path against the pure-JAX reference.
    #     tile_m=8 forces a multi-dst-tile grid even at this toy N so the tiled
    #     accumulator / finalize code path is exercised.
    out_f32 = multi_head_block_forward(x, edge_index, params, min_score=0.7,
                                       tile_m=8, matmul_dtype=jnp.float32)
    out_f32 = jax.block_until_ready(out_f32)
    ref = _reference(x, edge_index, params, min_score=0.7)
    if not jnp.allclose(out_f32, ref, atol=1e-4, rtol=1e-4):
        raise AssertionError("Pallas kernel (f32 path) does not match reference")

    # (2) Production path: bf16 adjacency-matmul operands (v6e/v7x MXU rate).
    #     min_score=0.0 keeps every node, so the tiled adjacency accumulation
    #     and the rel-weight matmul are exercised non-trivially.  Loose
    #     tolerance because the MXU operands are bf16 while the reference
    #     runs in f32.
    out_bf16 = multi_head_block_forward(x, edge_index, params, min_score=0.0,
                                        tile_m=8)
    out_bf16 = jax.block_until_ready(out_bf16)
    ref0 = _reference(x, edge_index, params, min_score=0.0)
    if not jnp.allclose(out_bf16, ref0, atol=5e-2, rtol=5e-2):
        raise AssertionError("Pallas kernel (bf16 path) deviates too much from reference")

    print("KERNEL_OK")
</pallas_src>

<mosaic_0001>
module attributes {stable_mosaic.version = 11 : i64} {
  func.func @_conv_kernel(%arg0: i32, %arg1: i32, %arg2: memref<16x8xf32, #tpu.memory_space<vmem>>, %arg3: memref<8x8xf32, #tpu.memory_space<vmem>>, %arg4: memref<16x2xf32, #tpu.memory_space<vmem>>, %arg5: memref<8x2xf32, #tpu.memory_space<vmem>>, %arg6: memref<8x2xf32, #tpu.memory_space<vmem>>, %arg7: memref<8x16xf32, #tpu.memory_space<vmem>>, %arg8: memref<2x8x4xf32, #tpu.memory_space<vmem>>, %arg9: memref<2x8x4xf32, #tpu.memory_space<vmem>>, %arg10: memref<2x1x4xf32, #tpu.memory_space<vmem>>, %arg11: memref<8x8xf32, #tpu.memory_space<vmem>>, %arg12: memref<1x1x8xf32, #tpu.memory_space<vmem>>, %arg13: memref<1x1x8xf32, #tpu.memory_space<vmem>>, %arg14: memref<2x8x8xf32, #tpu.memory_space<vmem>>) attributes {dimension_semantics = [#tpu.dimension_semantics<parallel>, #tpu.dimension_semantics<arbitrary>], iteration_bounds = array<i64: 2, 1>, scalar_prefetch = 0 : i64, scratch_operands = 1 : i64, tpu.core_type = #tpu.core_type<tc>, window_params = [{transform_indices = @transform_0, window_bounds = array<i64: 16, 8>}, {transform_indices = @transform_1, window_bounds = array<i64: 8, 8>}, {transform_indices = @transform_2, window_bounds = array<i64: 16, 2>}, {transform_indices = @transform_3, window_bounds = array<i64: 8, 2>}, {transform_indices = @transform_4, window_bounds = array<i64: 8, 2>}, {transform_indices = @transform_5, window_bounds = array<i64: 8, 16>}, {pipeline_mode = #tpu.pipeline_mode<synchronous>, transform_indices = @transform_6, window_bounds = array<i64: 2, 8, 4>}, {pipeline_mode = #tpu.pipeline_mode<synchronous>, transform_indices = @transform_7, window_bounds = array<i64: 2, 8, 4>}, {pipeline_mode = #tpu.pipeline_mode<synchronous>, transform_indices = @transform_8, window_bounds = array<i64: 2, 1, 4>}, {transform_indices = @transform_9, window_bounds = array<i64: 8, 8>}, {transform_indices = @transform_10, window_bounds = array<i64: 1, 1, 8>}, {transform_indices = @transform_11, window_bounds = array<i64: 1, 1, 8>}]} {
    %c0_i32 = arith.constant 0 : i32
    %0 = arith.cmpi eq, %arg1, %c0_i32 : i32
    %1 = arith.extui %0 : i1 to i32
    %c0_i32_0 = arith.constant 0 : i32
    %2 = arith.cmpi ne, %1, %c0_i32_0 : i32
    scf.if %2 {
      %cst_20 = arith.constant 0.000000e+00 : f32
      %29 = vector.broadcast %cst_20 : f32 to vector<2x8x8xf32>
      %c0_21 = arith.constant 0 : index
      %c0_22 = arith.constant 0 : index
      %c0_23 = arith.constant 0 : index
      %30 = vector.load %arg14[%c0_21, %c0_22, %c0_23] : memref<2x8x8xf32, #tpu.memory_space<vmem>>, vector<2x8x8xf32>
      tpu.vector_store %arg14[%c0_21, %c0_22, %c0_23], %29 {strides = array<i32>} : memref<2x8x8xf32, #tpu.memory_space<vmem>>, vector<2x8x8xf32>,
    } else {
    }
    %c0 = arith.constant 0 : index
    %c0_1 = arith.constant 0 : index
    %3 = vector.load %arg7[%c0, %c0_1] : memref<8x16xf32, #tpu.memory_space<vmem>>, vector<8x16xf32>
    %c0_2 = arith.constant 0 : index
    %c0_3 = arith.constant 0 : index
    %4 = vector.load %arg2[%c0_2, %c0_3] : memref<16x8xf32, #tpu.memory_space<vmem>>, vector<16x8xf32>
    %c0_4 = arith.constant 0 : index
    %c0_5 = arith.constant 0 : index
    %5 = vector.load %arg4[%c0_4, %c0_5] : memref<16x2xf32, #tpu.memory_space<vmem>>, vector<16x2xf32>
    %6 = vector.extract_strided_slice %5 {offsets = [0, 0], sizes = [16, 1], strides = [1, 1]} : vector<16x2xf32> to vector<16x1xf32>
    %7 = vector.broadcast %6 : vector<16x1xf32> to vector<16x8xf32>
    %8 = arith.mulf %4, %7 : vector<16x8xf32>
    %c0_6 = arith.constant 0 : index
    %c0_7 = arith.constant 0 : index
    %c0_8 = arith.constant 0 : index
    %9 = vector.load %arg14[%c0_6, %c0_7, %c0_8] : memref<2x8x8xf32, #tpu.memory_space<vmem>>, vector<1x8x8xf32>
    %10 = vector.shape_cast %9 : vector<1x8x8xf32> to vector<8x8xf32>
    %cst = arith.constant dense<0.000000e+00> : vector<8x8xf32>
    %11 = tpu.matmul %3, %8, %cst {dimension_numbers = #tpu.dot_dimension_numbers<[1], [0], [0], [1], [0, 0, 1, 1], [], []>} : vector<8x16xf32>, vector<16x8xf32>, vector<8x8xf32> -> vector<8x8xf32>
    %12 = arith.addf %10, %11 : vector<8x8xf32>
    %c0_9 = arith.constant 0 : index
    %c0_10 = arith.constant 0 : index
    %c0_11 = arith.constant 0 : index
    %13 = vector.load %arg14[%c0_9, %c0_10, %c0_11] : memref<2x8x8xf32, #tpu.memory_space<vmem>>, vector<1x8x8xf32>
    %14 = vector.shape_cast %13 : vector<1x8x8xf32> to vector<8x8xf32>
    %15 = vector.shape_cast %12 : vector<8x8xf32> to vector<1x8x8xf32>
    tpu.vector_store %arg14[%c0_9, %c0_10, %c0_11], %15 {strides = array<i32>} : memref<2x8x8xf32, #tpu.memory_space<vmem>>, vector<1x8x8xf32>,
    %16 = vector.extract_strided_slice %5 {offsets = [0, 1], sizes = [16, 1], strides = [1, 1]} : vector<16x2xf32> to vector<16x1xf32>
    %17 = vector.broadcast %16 : vector<16x1xf32> to vector<16x8xf32>
    %18 = arith.mulf %4, %17 : vector<16x8xf32>
    %c1 = arith.constant 1 : index
    %c0_12 = arith.constant 0 : index
    %c0_13 = arith.constant 0 : index
    %19 = vector.load %arg14[%c1, %c0_12, %c0_13] : memref<2x8x8xf32, #tpu.memory_space<vmem>>, vector<1x8x8xf32>
    %20 = vector.shape_cast %19 : vector<1x8x8xf32> to vector<8x8xf32>
    %cst_14 = arith.constant dense<0.000000e+00> : vector<8x8xf32>
    %21 = tpu.matmul %3, %18, %cst_14 {dimension_numbers = #tpu.dot_dimension_numbers<[1], [0], [0], [1], [0, 0, 1, 1], [], []>} : vector<8x16xf32>, vector<16x8xf32>, vector<8x8xf32> -> vector<8x8xf32>
    %22 = arith.addf %20, %21 : vector<8x8xf32>
    %c1_15 = arith.constant 1 : index
    %c0_16 = arith.constant 0 : index
    %c0_17 = arith.constant 0 : index
    %23 = vector.load %arg14[%c1_15, %c0_16, %c0_17] : memref<2x8x8xf32, #tpu.memory_space<vmem>>, vector<1x8x8xf32>
    %24 = vector.shape_cast %23 : vector<1x8x8xf32> to vector<8x8xf32>
    %25 = vector.shape_cast %22 : vector<8x8xf32> to vector<1x8x8xf32>
    tpu.vector_store %arg14[%c1_15, %c0_16, %c0_17], %25 {strides = array<i32>} : memref<2x8x8xf32, #tpu.memory_space<vmem>>, vector<1x8x8xf32>,
    %c0_i32_18 = arith.constant 0 : i32
    %26 = arith.cmpi eq, %arg1, %c0_i32_18 : i32
    %27 = arith.extui %26 : i1 to i32
    %c0_i32_19 = arith.constant 0 : i32
    %28 = arith.cmpi ne, %27, %c0_i32_19 : i32
    scf.if %28 {
      %c0_20 = arith.constant 0 : index
      %c0_21 = arith.constant 0 : index
      %29 = vector.load %arg3[%c0_20, %c0_21] : memref<8x8xf32, #tpu.memory_space<vmem>>, vector<8x8xf32>
      %c0_22 = arith.constant 0 : index
      %c0_23 = arith.constant 0 : index
      %30 = vector.load %arg5[%c0_22, %c0_23] : memref<8x2xf32, #tpu.memory_space<vmem>>, vector<8x2xf32>
      %c0_24 = arith.constant 0 : index
      %c0_25 = arith.constant 0 : index
      %31 = vector.load %arg6[%c0_24, %c0_25] : memref<8x2xf32, #tpu.memory_space<vmem>>, vector<8x2xf32>
      %32 = vector.extract_strided_slice %31 {offsets = [0, 0], sizes = [8, 1], strides = [1, 1]} : vector<8x2xf32> to vector<8x1xf32>
      %c0_26 = arith.constant 0 : index
      %c0_27 = arith.constant 0 : index
      %c0_28 = arith.constant 0 : index
      %33 = vector.load %arg14[%c0_26, %c0_27, %c0_28] : memref<2x8x8xf32, #tpu.memory_space<vmem>>, vector<1x8x8xf32>
      %34 = vector.shape_cast %33 : vector<1x8x8xf32> to vector<8x8xf32>
      %35 = vector.broadcast %32 : vector<8x1xf32> to vector<8x8xf32>
      %36 = arith.mulf %34, %35 : vector<8x8xf32>
      %37 = vector.extract_strided_slice %30 {offsets = [0, 0], sizes = [8, 1], strides = [1, 1]} : vector<8x2xf32> to vector<8x1xf32>
      %38 = vector.broadcast %37 : vector<8x1xf32> to vector<8x8xf32>
      %39 = arith.mulf %29, %38 : vector<8x8xf32>
      %c0_29 = arith.constant 0 : index
      %c0_30 = arith.constant 0 : index
      %c0_31 = arith.constant 0 : index
      %40 = vector.load %arg8[%c0_29, %c0_30, %c0_31] : memref<2x8x4xf32, #tpu.memory_space<vmem>>, vector<1x8x4xf32>
      %41 = vector.shape_cast %40 : vector<1x8x4xf32> to vector<8x4xf32>
      %cst_32 = arith.constant dense<0.000000e+00> : vector<8x4xf32>
      %42 = tpu.matmul %36, %41, %cst_32 {dimension_numbers = #tpu.dot_dimension_numbers<[1], [0], [0], [1], [0, 0, 1, 1], [], []>} : vector<8x8xf32>, vector<8x4xf32>, vector<8x4xf32> -> vector<8x4xf32>
      %c0_33 = arith.constant 0 : index
      %c0_34 = arith.constant 0 : index
      %c0_35 = arith.constant 0 : index
      %43 = vector.load %arg9[%c0_33, %c0_34, %c0_35] : memref<2x8x4xf32, #tpu.memory_space<vmem>>, vector<1x8x4xf32>
      %44 = vector.shape_cast %43 : vector<1x8x4xf32> to vector<8x4xf32>
      %cst_36 = arith.constant dense<0.000000e+00> : vector<8x4xf32>
      %45 = tpu.matmul %39, %44, %cst_36 {dimension_numbers = #tpu.dot_dimension_numbers<[1], [0], [0], [1], [0, 0, 1, 1], [], []>} : vector<8x8xf32>, vector<8x4xf32>, vector<8x4xf32> -> vector<8x4xf32>
      %46 = arith.addf %42, %45 : vector<8x4xf32>
      %c0_37 = arith.constant 0 : index
      %c0_38 = arith.constant 0 : index
      %c0_39 = arith.constant 0 : index
      %47 = vector.load %arg10[%c0_37, %c0_38, %c0_39] : memref<2x1x4xf32, #tpu.memory_space<vmem>>, vector<1x1x4xf32>
      %48 = vector.shape_cast %47 : vector<1x1x4xf32> to vector<1x4xf32>
      %49 = vector.broadcast %48 : vector<1x4xf32> to vector<8x4xf32>
      %50 = arith.addf %46, %49 : vector<8x4xf32>
      %cst_40 = arith.constant 0.000000e+00 : f32
      %51 = vector.broadcast %cst_40 : f32 to vector<8x4xf32>
      %52 = arith.cmpf oge, %50, %51 : vector<8x4xf32>
      %cst_41 = arith.constant 0.00999999977 : f32
      %53 = vector.broadcast %cst_41 : f32 to vector<8x4xf32>
      %54 = arith.mulf %53, %50 : vector<8x4xf32>
      %55 = arith.select %52, %50, %54 : vector<8x4xi1>, vector<8x4xf32>
      %56 = vector.broadcast %32 : vector<8x1xf32> to vector<8x4xf32>
      %57 = arith.mulf %55, %56 : vector<8x4xf32>
      %c0_42 = arith.constant 0 : index
      %c0_43 = arith.constant 0 : index
      %58 = vector.load %arg11[%c0_42, %c0_43] : memref<8x8xf32, #tpu.memory_space<vmem>>, vector<8x4xf32>
      tpu.vector_store %arg11[%c0_42, %c0_43], %57 {strides = array<i32>} : memref<8x8xf32, #tpu.memory_space<vmem>>, vector<8x4xf32>,
      %59 = vector.extract_strided_slice %31 {offsets = [0, 1], sizes = [8, 1], strides = [1, 1]} : vector<8x2xf32> to vector<8x1xf32>
      %c1_44 = arith.constant 1 : index
      %c0_45 = arith.constant 0 : index
      %c0_46 = arith.constant 0 : index
      %60 = vector.load %arg14[%c1_44, %c0_45, %c0_46] : memref<2x8x8xf32, #tpu.memory_space<vmem>>, vector<1x8x8xf32>
      %61 = vector.shape_cast %60 : vector<1x8x8xf32> to vector<8x8xf32>
      %62 = vector.broadcast %59 : vector<8x1xf32> to vector<8x8xf32>
      %63 = arith.mulf %61, %62 : vector<8x8xf32>
      %64 = vector.extract_strided_slice %30 {offsets = [0, 1], sizes = [8, 1], strides = [1, 1]} : vector<8x2xf32> to vector<8x1xf32>
      %65 = vector.broadcast %64 : vector<8x1xf32> to vector<8x8xf32>
      %66 = arith.mulf %29, %65 : vector<8x8xf32>
      %c1_47 = arith.constant 1 : index
      %c0_48 = arith.constant 0 : index
      %c0_49 = arith.constant 0 : index
      %67 = vector.load %arg8[%c1_47, %c0_48, %c0_49] : memref<2x8x4xf32, #tpu.memory_space<vmem>>, vector<1x8x4xf32>
      %68 = vector.shape_cast %67 : vector<1x8x4xf32> to vector<8x4xf32>
      %cst_50 = arith.constant dense<0.000000e+00> : vector<8x4xf32>
      %69 = tpu.matmul %63, %68, %cst_50 {dimension_numbers = #tpu.dot_dimension_numbers<[1], [0], [0], [1], [0, 0, 1, 1], [], []>} : vector<8x8xf32>, vector<8x4xf32>, vector<8x4xf32> -> vector<8x4xf32>
      %c1_51 = arith.constant 1 : index
      %c0_52 = arith.constant 0 : index
      %c0_53 = arith.constant 0 : index
      %70 = vector.load %arg9[%c1_51, %c0_52, %c0_53] : memref<2x8x4xf32, #tpu.memory_space<vmem>>, vector<1x8x4xf32>
      %71 = vector.shape_cast %70 : vector<1x8x4xf32> to vector<8x4xf32>
      %cst_54 = arith.constant dense<0.000000e+00> : vector<8x4xf32>
      %72 = tpu.matmul %66, %71, %cst_54 {dimension_numbers = #tpu.dot_dimension_numbers<[1], [0], [0], [1], [0, 0, 1, 1], [], []>} : vector<8x8xf32>, vector<8x4xf32>, vector<8x4xf32> -> vector<8x4xf32>
      %73 = arith.addf %69, %72 : vector<8x4xf32>
      %c1_55 = arith.constant 1 : index
      %c0_56 = arith.constant 0 : index
      %c0_57 = arith.constant 0 : index
      %74 = vector.load %arg10[%c1_55, %c0_56, %c0_57] : memref<2x1x4xf32, #tpu.memory_space<vmem>>, vector<1x1x4xf32>
      %75 = vector.shape_cast %74 : vector<1x1x4xf32> to vector<1x4xf32>
      %76 = vector.broadcast %75 : vector<1x4xf32> to vector<8x4xf32>
      %77 = arith.addf %73, %76 : vector<8x4xf32>
      %cst_58 = arith.constant 0.000000e+00 : f32
      %78 = vector.broadcast %cst_58 : f32 to vector<8x4xf32>
      %79 = arith.cmpf oge, %77, %78 : vector<8x4xf32>
      %cst_59 = arith.constant 0.00999999977 : f32
      %80 = vector.broadcast %cst_59 : f32 to vector<8x4xf32>
      %81 = arith.mulf %80, %77 : vector<8x4xf32>
      %82 = arith.select %79, %77, %81 : vector<8x4xi1>, vector<8x4xf32>
      %83 = vector.broadcast %59 : vector<8x1xf32> to vector<8x4xf32>
      %84 = arith.mulf %82, %83 : vector<8x4xf32>
      %c0_60 = arith.constant 0 : index
      %c4 = arith.constant 4 : index
      %85 = vector.load %arg11[%c0_60, %c4] : memref<8x8xf32, #tpu.memory_space<vmem>>, vector<8x4xf32>
      tpu.vector_store %arg11[%c0_60, %c4], %84 {strides = array<i32>} : memref<8x8xf32, #tpu.memory_space<vmem>>, vector<8x4xf32>,
      %c0_61 = arith.constant 0 : index
      %c0_62 = arith.constant 0 : index
      %86 = vector.load %arg11[%c0_61, %c0_62] : memref<8x8xf32, #tpu.memory_space<vmem>>, vector<8x8xf32>
      %cst_63 = arith.constant dense<0.000000e+00> : vector<8xf32>
      %87 = vector.multi_reduction <add>, %86, %cst_63 [0] : vector<8x8xf32> to vector<8xf32>
      %88 = vector.shape_cast %87 : vector<8xf32> to vector<1x8xf32>
      %c0_64 = arith.constant 0 : index
      %c0_65 = arith.constant 0 : index
      %c0_66 = arith.constant 0 : index
      %89 = vector.load %arg12[%c0_64, %c0_65, %c0_66] : memref<1x1x8xf32, #tpu.memory_space<vmem>>, vector<1x1x8xf32>
      %90 = vector.shape_cast %89 : vector<1x1x8xf32> to vector<1x8xf32>
      %91 = vector.shape_cast %88 : vector<1x8xf32> to vector<1x1x8xf32>
      tpu.vector_store %arg12[%c0_64, %c0_65, %c0_66], %91 {strides = array<i32>} : memref<1x1x8xf32, #tpu.memory_space<vmem>>, vector<1x1x8xf32>,
      %92 = arith.mulf %86, %86 : vector<8x8xf32>
      %cst_67 = arith.constant dense<0.000000e+00> : vector<8xf32>
      %93 = vector.multi_reduction <add>, %92, %cst_67 [0] : vector<8x8xf32> to vector<8xf32>
      %94 = vector.shape_cast %93 : vector<8xf32> to vector<1x8xf32>
      %c0_68 = arith.constant 0 : index
      %c0_69 = arith.constant 0 : index
      %c0_70 = arith.constant 0 : index
      %95 = vector.load %arg13[%c0_68, %c0_69, %c0_70] : memref<1x1x8xf32, #tpu.memory_space<vmem>>, vector<1x1x8xf32>
      %96 = vector.shape_cast %95 : vector<1x1x8xf32> to vector<1x8xf32>
      %97 = vector.shape_cast %94 : vector<1x8xf32> to vector<1x1x8xf32>
      tpu.vector_store %arg13[%c0_68, %c0_69, %c0_70], %97 {strides = array<i32>} : memref<1x1x8xf32, #tpu.memory_space<vmem>>, vector<1x1x8xf32>,
    } else {
    }
    return
  }
  func.func @transform_0(%arg0: i32, %arg1: i32) -> (i32, i32) {
    %c0_i32 = arith.constant 0 : i32
    %c0_i32_0 = arith.constant 0 : i32
    return %arg1, %c0_i32 : i32, i32
  }
  func.func @transform_1(%arg0: i32, %arg1: i32) -> (i32, i32) {
    %c0_i32 = arith.constant 0 : i32
    %c0_i32_0 = arith.constant 0 : i32
    return %arg0, %c0_i32 : i32, i32
  }
  func.func @transform_2(%arg0: i32, %arg1: i32) -> (i32, i32) {
    %c0_i32 = arith.constant 0 : i32
    %c0_i32_0 = arith.constant 0 : i32
    return %arg1, %c0_i32 : i32, i32
  }
  func.func @transform_3(%arg0: i32, %arg1: i32) -> (i32, i32) {
    %c0_i32 = arith.constant 0 : i32
    %c0_i32_0 = arith.constant 0 : i32
    return %arg0, %c0_i32 : i32, i32
  }
  func.func @transform_4(%arg0: i32, %arg1: i32) -> (i32, i32) {
    %c0_i32 = arith.constant 0 : i32
    %c0_i32_0 = arith.constant 0 : i32
    return %arg0, %c0_i32 : i32, i32
  }
  func.func @transform_5(%arg0: i32, %arg1: i32) -> (i32, i32) {
    %c0_i32 = arith.constant 0 : i32
    return %arg0, %arg1 : i32, i32
  }
  func.func @transform_6(%arg0: i32, %arg1: i32) -> (i32, i32, i32) {
    %c0_i32 = arith.constant 0 : i32
    %c0_i32_0 = arith.constant 0 : i32
    %c0_i32_1 = arith.constant 0 : i32
    %c0_i32_2 = arith.constant 0 : i32
    return %c0_i32, %c0_i32_0, %c0_i32_1 : i32, i32, i32
  }
  func.func @transform_7(%arg0: i32, %arg1: i32) -> (i32, i32, i32) {
    %c0_i32 = arith.constant 0 : i32
    %c0_i32_0 = arith.constant 0 : i32
    %c0_i32_1 = arith.constant 0 : i32
    %c0_i32_2 = arith.constant 0 : i32
    return %c0_i32, %c0_i32_0, %c0_i32_1 : i32, i32, i32
  }
  func.func @transform_8(%arg0: i32, %arg1: i32) -> (i32, i32, i32) {
    %c0_i32 = arith.constant 0 : i32
    %c0_i32_0 = arith.constant 0 : i32
    %c0_i32_1 = arith.constant 0 : i32
    %c0_i32_2 = arith.constant 0 : i32
    return %c0_i32, %c0_i32_0, %c0_i32_1 : i32, i32, i32
  }
  func.func @transform_9(%arg0: i32, %arg1: i32) -> (i32, i32) {
    %c0_i32 = arith.constant 0 : i32
    %c0_i32_0 = arith.constant 0 : i32
    return %arg0, %c0_i32 : i32, i32
  }
  func.func @transform_10(%arg0: i32, %arg1: i32) -> (i32, i32, i32) {
    %c0_i32 = arith.constant 0 : i32
    %c0_i32_0 = arith.constant 0 : i32
    %c0_i32_1 = arith.constant 0 : i32
    return %arg0, %c0_i32, %c0_i32_0 : i32, i32, i32
  }
  func.func @transform_11(%arg0: i32, %arg1: i32) -> (i32, i32, i32) {
    %c0_i32 = arith.constant 0 : i32
    %c0_i32_0 = arith.constant 0 : i32
    %c0_i32_1 = arith.constant 0 : i32
    return %arg0, %c0_i32, %c0_i32_0 : i32, i32, i32
  }
}

</mosaic_0001>

<llo_original>
// kernel: tpu_custom_call.1
$region0: #{tpu_custom_call.1}
  #allocation0 [shape = 'u32[]', space=smem, size = 0x4, offset = 0x4, fixed_abs, tag = 'smem constant byte address 0x4 - core index']
  #allocation1 [shape = 'u32[144,128]{1,0:T(1,128)}', space=vmem, size = 0x12000, scoped, tag = 'internal scratch']
  #allocation2 [shape = 'f32[2,8,8]{2,1,0:T(8,128)}', space=vmem, size = 0x2000, scoped, tag = 'scratch operand']
  %s0 = inlined_call_operand.vmem [shape: f32[16,8], index: 0, kind: input, shape index: {}]
  %s1 = inlined_call_operand.vmem [shape: f32[16,8], index: 1, kind: input, shape index: {}]
  %s2 = inlined_call_operand.vmem [shape: f32[16,2], index: 2, kind: input, shape index: {}]
  %s3 = inlined_call_operand.vmem [shape: f32[16,2], index: 3, kind: input, shape index: {}]
  %s4 = inlined_call_operand.vmem [shape: f32[16,2], index: 4, kind: input, shape index: {}]
  %s5 = inlined_call_operand.vmem [shape: f32[16,16], index: 5, kind: input, shape index: {}]
  %s6 = inlined_call_operand.vmem [shape: f32[2,8,4], index: 6, kind: input, shape index: {}]
  %s7 = inlined_call_operand.vmem [shape: f32[2,8,4], index: 7, kind: input, shape index: {}]
  %s8 = inlined_call_operand.vmem [shape: f32[2,1,4], index: 8, kind: input, shape index: {}]
  %s9 = inlined_call_operand.vmem [shape: f32[16,8], index: 9, kind: output, shape index: {0}]
  %s10 = inlined_call_operand.hbm [shape: f32[2,1,8], index: 10, kind: output, shape index: {1}]
  %s11 = inlined_call_operand.hbm [shape: f32[2,1,8], index: 11, kind: output, shape index: {2}]
  %12 = xla_tuple %s9, %s10, %s11
  %s13 = sld [smem:[#allocation0]]
  $region93: #{tpu_custom_call.1} parent=0
    _
  %s15 = ssub.s32 1, %s13
  %s16 = scalar_select 0, %s15, %s13
  $region1: #{tpu_custom_call.1} parent=0
    #allocation3 [shape = 'u8[1024]{0}', space=vmem, size = 0x400, scoped, tag = 'output window, operand 1']
    #allocation4 [shape = 's32[2]{0}', space=sflag, size = 0x8, scoped, tag = 'scoped memory for tpu_custom_call.1']
    #allocation5 [shape = 'u8[1024]{0}', space=vmem, size = 0x400, scoped, tag = 'output window, operand 2']
    #allocation6 [shape = 's32[2]{0}', space=sflag, size = 0x8, scoped, tag = 'scoped memory for tpu_custom_call.1']
    %17 = vsyncpa [#allocation4], 0
    %s18 = scalar_lea.sflag [#allocation4], 1
    %19 = vsyncpa %s18, 0
    %20 = vsyncpa [#allocation6], 0
    %s21 = scalar_lea.sflag [#allocation6], 1
    %22 = vsyncpa %s21, 0
    loop: start=0, step=1, limit=4
    $region2: #{tpu_custom_call.1} parent=1 // loop_pre_header
      _
    $region3: #{tpu_custom_call.1} parent=1 // loop_header
      %s24 = sphi 0, %s28
      %p25 = scmp.ge.s32.totalorder %s24, 4
      %s31 = sphi 0, %s43
      %s32 = sphi 0, %s39
      %s33 = sphi 0, %s31
      %s34 = sphi 0, %s32
      %s35 = sphi 0, %s33
      %s36 = sphi 0, %s34
      %s46 = sphi 0, %s48
      %s49 = sphi 0, %s46
      %s50 = sphi 0, %s49
      %s66 = sphi 0, %s50
      %s72 = sphi 0, %s74
      %s75 = sphi 0, %s72
      %s76 = sphi 0, %s75
      %s92 = sphi 0, %s76
      %s98 = sphi 0, %s100
      %s101 = sphi 0, %s98
      %s102 = sphi 0, %s101
      %s118 = sphi 0, %s102
      %s124 = sphi 0, %s126
      %s127 = sphi 0, %s124
      %s128 = sphi 0, %s127
      %s144 = sphi 0, %s128
      %s150 = sphi 0, %s152
      %s153 = sphi 0, %s150
      %s154 = sphi 0, %s153
      %s170 = sphi 0, %s154
      %s178 = sphi 0, %s180
      %s181 = sphi 0, %s178
      %s182 = sphi 0, %s181
      %s198 = sphi 0, %s182
      %s202 = sphi 0, %s202
      %s204 = sphi 0, %s202
      %s205 = sphi 0, %s204
      %s219 = sphi 0, %s205
      %s223 = sphi 0, %s223
      %s225 = sphi 0, %s223
      %s226 = sphi 0, %s225
      %s240 = sphi 0, %s226
      %s244 = sphi 0, %s244
      %s246 = sphi 0, %s244
      %s247 = sphi 0, %s246
      %s261 = sphi 0, %s247
      %s267 = sphi 0, %s269
      %s270 = sphi 0, %s267
      %s271 = sphi 0, %s270
      %s287 = sphi 0, %s271
      %s293 = sphi 0, %s295
      %s296 = sphi 0, %s293
      %s297 = sphi 0, %s296
      %s313 = sphi 0, %s297
      %s319 = sphi 0, %s321
      %s322 = sphi 0, %s319
      %s323 = sphi 0, %s322
      %s339 = sphi 0, %s323
    $region4: #{tpu_custom_call.1} parent=1 // loop_header_branch
      %27 = sbr.rel (%p25) target = $region8
    $region5: #{tpu_custom_call.1} parent=1 // loop_body
      %s29 = ssub.s32 %s24, 1
      %s30 = ssub.s32 %s24, 2
      %s37 = sadd.s32 1, %s32
      %p38 = scmp.ge.s32.totalorder %s37, 1
      %s39 = scalar_select %p38, 0, %s37
      %s40 = sadd.s32 1, %s31
      %s41 = scalar_select %p38, %s40, %s31
      %p42 = scmp.ge.s32.totalorder %s41, 2
      %s43 = scalar_select %p42, 0, %s41
      %s44 = ssub.s32 %s32, %s39
      %p45 = scmp.eq.s32.totalorder %s44, 0
      %s47 = sadd.s32 %s46, 1
      %s48 = scalar_select %p45, %s46, %s47
      %p51 = pneg %p45
      %p52 = scmp.eq.s32.totalorder %s24, 1
      %p53 = por %p51, %p52
      %p54 = scmp.ne.s32.totalorder %s46, %s49
      %p55 = scmp.eq.s32.totalorder %s24, 0
      %p56 = por %p54, %p55
      %p57 = scmp.ne.s32.totalorder %s46, %s49
      %p58 = scmp.eq.s32.totalorder %s29, 1
      %p59 = por %p57, %p58
      %p60 = scmp.ne.s32.totalorder %s49, %s50
      %p61 = scmp.eq.s32.totalorder %s29, 0
      %p62 = por %p60, %p61
      %p63 = scmp.ne.s32.totalorder %s49, %s50
      %p64 = scmp.eq.s32.totalorder %s30, 1
      %p65 = por %p63, %p64
      %p67 = scmp.ne.s32.totalorder %s50, %s66
      %p68 = scmp.eq.s32.totalorder %s30, 0
      %p69 = por %p67, %p68
      %s70 = ssub.s32 %s31, %s43
      %p71 = scmp.eq.s32.totalorder %s70, 0
      %s73 = sadd.s32 %s72, 1
      %s74 = scalar_select %p71, %s72, %s73
      %p77 = pneg %p71
      %p78 = scmp.eq.s32.totalorder %s24, 1
      %p79 = por %p77, %p78
      %p80 = scmp.ne.s32.totalorder %s72, %s75
      %p81 = scmp.eq.s32.totalorder %s24, 0
      %p82 = por %p80, %p81
      %p83 = scmp.ne.s32.totalorder %s72, %s75
      %p84 = scmp.eq.s32.totalorder %s29, 1
      %p85 = por %p83, %p84
      %p86 = scmp.ne.s32.totalorder %s75, %s76
      %p87 = scmp.eq.s32.totalorder %s29, 0
      %p88 = por %p86, %p87
      %p89 = scmp.ne.s32.totalorder %s75, %s76
      %p90 = scmp.eq.s32.totalorder %s30, 1
      %p91 = por %p89, %p90
      %p93 = scmp.ne.s32.totalorder %s76, %s92
      %p94 = scmp.eq.s32.totalorder %s30, 0
      %p95 = por %p93, %p94
      %s96 = ssub.s32 %s32, %s39
      %p97 = scmp.eq.s32.totalorder %s96, 0
      %s99 = sadd.s32 %s98, 1
      %s100 = scalar_select %p97, %s98, %s99
      %p103 = pneg %p97
      %p104 = scmp.eq.s32.totalorder %s24, 1
      %p105 = por %p103, %p104
      %p106 = scmp.ne.s32.totalorder %s98, %s101
      %p107 = scmp.eq.s32.totalorder %s24, 0
      %p108 = por %p106, %p107
      %p109 = scmp.ne.s32.totalorder %s98, %s101
      %p110 = scmp.eq.s32.totalorder %s29, 1
      %p111 = por %p109, %p110
      %p112 = scmp.ne.s32.totalorder %s101, %s102
      %p113 = scmp.eq.s32.totalorder %s29, 0
      %p114 = por %p112, %p113
      %p115 = scmp.ne.s32.totalorder %s101, %s102
      %p116 = scmp.eq.s32.totalorder %s30, 1
      %p117 = por %p115, %p116
      %p119 = scmp.ne.s32.totalorder %s102, %s118
      %p120 = scmp.eq.s32.totalorder %s30, 0
      %p121 = por %p119, %p120
      %s122 = ssub.s32 %s31, %s43
      %p123 = scmp.eq.s32.totalorder %s122, 0
      %s125 = sadd.s32 %s124, 1
      %s126 = scalar_select %p123, %s124, %s125
      %p129 = pneg %p123
      %p130 = scmp.eq.s32.totalorder %s24, 1
      %p131 = por %p129, %p130
      %p132 = scmp.ne.s32.totalorder %s124, %s127
      %p133 = scmp.eq.s32.totalorder %s24, 0
      %p134 = por %p132, %p133
      %p135 = scmp.ne.s32.totalorder %s124, %s127
      %p136 = scmp.eq.s32.totalorder %s29, 1
      %p137 = por %p135, %p136
      %p138 = scmp.ne.s32.totalorder %s127, %s128
      %p139 = scmp.eq.s32.totalorder %s29, 0
      %p140 = por %p138, %p139
      %p141 = scmp.ne.s32.totalorder %s127, %s128
      %p142 = scmp.eq.s32.totalorder %s30, 1
      %p143 = por %p141, %p142
      %p145 = scmp.ne.s32.totalorder %s128, %s144
      %p146 = scmp.eq.s32.totalorder %s30, 0
      %p147 = por %p145, %p146
      %s148 = ssub.s32 %s31, %s43
      %p149 = scmp.eq.s32.totalorder %s148, 0
      %s151 = sadd.s32 %s150, 1
      %s152 = scalar_select %p149, %s150, %s151
      %p155 = pneg %p149
      %p156 = scmp.eq.s32.totalorder %s24, 1
      %p157 = por %p155, %p156
      %p158 = scmp.ne.s32.totalorder %s150, %s153
      %p159 = scmp.eq.s32.totalorder %s24, 0
      %p160 = por %p158, %p159
      %p161 = scmp.ne.s32.totalorder %s150, %s153
      %p162 = scmp.eq.s32.totalorder %s29, 1
      %p163 = por %p161, %p162
      %p164 = scmp.ne.s32.totalorder %s153, %s154
      %p165 = scmp.eq.s32.totalorder %s29, 0
      %p166 = por %p164, %p165
      %p167 = scmp.ne.s32.totalorder %s153, %s154
      %p168 = scmp.eq.s32.totalorder %s30, 1
      %p169 = por %p167, %p168
      %p171 = scmp.ne.s32.totalorder %s154, %s170
      %p172 = scmp.eq.s32.totalorder %s30, 0
      %p173 = por %p171, %p172
      %s174 = ssub.s32 %s31, %s43
      %s175 = ssub.s32 %s32, %s39
      %s176 = sor.u32 %s174, %s175
      %p177 = scmp.eq.s32.totalorder %s176, 0
      %s179 = sadd.s32 %s178, 1
      %s180 = scalar_select %p177, %s178, %s179
      %p183 = pneg %p177
      %p184 = scmp.eq.s32.totalorder %s24, 1
      %p185 = por %p183, %p184
      %p186 = scmp.ne.s32.totalorder %s178, %s181
      %p187 = scmp.eq.s32.totalorder %s24, 0
      %p188 = por %p186, %p187
      %p189 = scmp.ne.s32.totalorder %s178, %s181
      %p190 = scmp.eq.s32.totalorder %s29, 1
      %p191 = por %p189, %p190
      %p192 = scmp.ne.s32.totalorder %s181, %s182
      %p193 = scmp.eq.s32.totalorder %s29, 0
      %p194 = por %p192, %p193
      %p195 = scmp.ne.s32.totalorder %s181, %s182
      %p196 = scmp.eq.s32.totalorder %s30, 1
      %p197 = por %p195, %p196
      %p199 = scmp.ne.s32.totalorder %s182, %s198
      %p200 = scmp.eq.s32.totalorder %s30, 0
      %p201 = por %p199, %p200
      %s203 = sadd.s32 %s202, 1
      %p206 = scmp.eq.s32.totalorder %s24, 1
      %p207 = scmp.ne.s32.totalorder %s202, %s204
      %p208 = scmp.eq.s32.totalorder %s24, 0
      %p209 = por %p207, %p208
      %p210 = scmp.ne.s32.totalorder %s202, %s204
      %p211 = scmp.eq.s32.totalorder %s29, 1
      %p212 = por %p210, %p211
      %p213 = scmp.ne.s32.totalorder %s204, %s205
      %p214 = scmp.eq.s32.totalorder %s29, 0
      %p215 = por %p213, %p214
      %p216 = scmp.ne.s32.totalorder %s204, %s205
      %p217 = scmp.eq.s32.totalorder %s30, 1
      %p218 = por %p216, %p217
      %p220 = scmp.ne.s32.totalorder %s205, %s219
      %p221 = scmp.eq.s32.totalorder %s30, 0
      %p222 = por %p220, %p221
      %s224 = sadd.s32 %s223, 1
      %p227 = scmp.eq.s32.totalorder %s24, 1
      %p228 = scmp.ne.s32.totalorder %s223, %s225
      %p229 = scmp.eq.s32.totalorder %s24, 0
      %p230 = por %p228, %p229
      %p231 = scmp.ne.s32.totalorder %s223, %s225
      %p232 = scmp.eq.s32.totalorder %s29, 1
      %p233 = por %p231, %p232
      %p234 = scmp.ne.s32.totalorder %s225, %s226
      %p235 = scmp.eq.s32.totalorder %s29, 0
      %p236 = por %p234, %p235
      %p237 = scmp.ne.s32.totalorder %s225, %s226
      %p238 = scmp.eq.s32.totalorder %s30, 1
      %p239 = por %p237, %p238
      %p241 = scmp.ne.s32.totalorder %s226, %s240
      %p242 = scmp.eq.s32.totalorder %s30, 0
      %p243 = por %p241, %p242
      %s245 = sadd.s32 %s244, 1
      %p248 = scmp.eq.s32.totalorder %s24, 1
      %p249 = scmp.ne.s32.totalorder %s244, %s246
      %p250 = scmp.eq.s32.totalorder %s24, 0
      %p251 = por %p249, %p250
      %p252 = scmp.ne.s32.totalorder %s244, %s246
      %p253 = scmp.eq.s32.totalorder %s29, 1
      %p254 = por %p252, %p253
      %p255 = scmp.ne.s32.totalorder %s246, %s247
      %p256 = scmp.eq.s32.totalorder %s29, 0
      %p257 = por %p255, %p256
      %p258 = scmp.ne.s32.totalorder %s246, %s247
      %p259 = scmp.eq.s32.totalorder %s30, 1
      %p260 = por %p258, %p259
      %p262 = scmp.ne.s32.totalorder %s247, %s261
      %p263 = scmp.eq.s32.totalorder %s30, 0
      %p264 = por %p262, %p263
      %s265 = ssub.s32 %s31, %s43
      %p266 = scmp.eq.s32.totalorder %s265, 0
      %s268 = sadd.s32 %s267, 1
      %s269 = scalar_select %p266, %s267, %s268
      %p272 = pneg %p266
      %p273 = scmp.eq.s32.totalorder %s24, 1
      %p274 = por %p272, %p273
      %p275 = scmp.ne.s32.totalorder %s267, %s270
      %p276 = scmp.eq.s32.totalorder %s24, 0
      %p277 = por %p275, %p276
      %p278 = scmp.ne.s32.totalorder %s267, %s270
      %p279 = scmp.eq.s32.totalorder %s29, 1
      %p280 = por %p278, %p279
      %p281 = scmp.ne.s32.totalorder %s270, %s271
      %p282 = scmp.eq.s32.totalorder %s29, 0
      %p283 = por %p281, %p282
      %p284 = scmp.ne.s32.totalorder %s270, %s271
      %p285 = scmp.eq.s32.totalorder %s30, 1
      %p286 = por %p284, %p285
      %p288 = scmp.ne.s32.totalorder %s271, %s287
      %p289 = scmp.eq.s32.totalorder %s30, 0
      %p290 = por %p288, %p289
      %s291 = ssub.s32 %s31, %s43
      %p292 = scmp.eq.s32.totalorder %s291, 0
      %s294 = sadd.s32 %s293, 1
      %s295 = scalar_select %p292, %s293, %s294
      %p298 = pneg %p292
      %p299 = scmp.eq.s32.totalorder %s24, 1
      %p300 = por %p298, %p299
      %p301 = scmp.ne.s32.totalorder %s293, %s296
      %p302 = scmp.eq.s32.totalorder %s24, 0
      %p303 = por %p301, %p302
      %p304 = scmp.ne.s32.totalorder %s293, %s296
      %p305 = scmp.eq.s32.totalorder %s29, 1
      %p306 = por %p304, %p305
      %p307 = scmp.ne.s32.totalorder %s296, %s297
      %p308 = scmp.eq.s32.totalorder %s29, 0
      %p309 = por %p307, %p308
      %p310 = scmp.ne.s32.totalorder %s296, %s297
      %p311 = scmp.eq.s32.totalorder %s30, 1
      %p312 = por %p310, %p311
      %p314 = scmp.ne.s32.totalorder %s297, %s313
      %p315 = scmp.eq.s32.totalorder %s30, 0
      %p316 = por %p314, %p315
      %s317 = ssub.s32 %s31, %s43
      %p318 = scmp.eq.s32.totalorder %s317, 0
      %s320 = sadd.s32 %s319, 1
      %s321 = scalar_select %p318, %s319, %s320
      %p324 = pneg %p318
      %p325 = scmp.eq.s32.totalorder %s24, 1
      %p326 = por %p324, %p325
      %p327 = scmp.ne.s32.totalorder %s319, %s322
      %p328 = scmp.eq.s32.totalorder %s24, 0
      %p329 = por %p327, %p328
      %p330 = scmp.ne.s32.totalorder %s319, %s322
      %p331 = scmp.eq.s32.totalorder %s29, 1
      %p332 = por %p330, %p331
      %p333 = scmp.ne.s32.totalorder %s322, %s323
      %p334 = scmp.eq.s32.totalorder %s29, 0
      %p335 = por %p333, %p334
      %p336 = scmp.ne.s32.totalorder %s322, %s323
      %p337 = scmp.eq.s32.totalorder %s30, 1
      %p338 = por %p336, %p337
      %p340 = scmp.ne.s32.totalorder %s323, %s339
      %p341 = scmp.eq.s32.totalorder %s30, 0
      %p342 = por %p340, %p341
      %p343 = scmp.le.s32.totalorder 1, %s24
      %p344 = scmp.lt.s32.totalorder %s24, 3
      %p345 = pnand %p343, %p344
      %p346 = pneg %p345
      // Predicated region
      $region9: #{tpu_custom_call.1} parent=5 // pred_check
        _
      $region10: #{tpu_custom_call.1} parent=5 // pred_check_branch
        %348 = sbr.rel (%p345) target = $region12
      $region11: #{tpu_custom_call.1} parent=5 // pred_region
        %s349 = ssub.s32 %s24, 1
        // Predicated region
        $region13: #{tpu_custom_call.1} parent=11 // pred_check
          %p350 = pneg %p62
        $region14: #{tpu_custom_call.1} parent=11 // pred_check_branch
          %352 = sbr.rel (%p350) target = $region16
        $region15: #{tpu_custom_call.1} parent=11 // pred_region
          %s353 = smul.u32 2, %s34
          %p354 = scmp.lt.s32.totalorder %s353, 1
          %s355 = scalar_select %p354, %s353, 1
          %s356 = smul.addr %s355, 8
          %s357 = scalar_lea.vmem %s0, %s356
          %s358 = smul.u32 2, %s34
        $region16: #{tpu_custom_call.1} parent=11 // pred_fallthru
          _
        // Predicated region
        $region17: #{tpu_custom_call.1} parent=11 // pred_check
          %p359 = pneg %p114
        $region18: #{tpu_custom_call.1} parent=11 // pred_check_branch
          %361 = sbr.rel (%p359) target = $region20
        $region19: #{tpu_custom_call.1} parent=11 // pred_region
          %s362 = smul.u32 2, %s34
          %p363 = scmp.lt.s32.totalorder %s362, 1
          %s364 = scalar_select %p363, %s362, 1
          %s365 = smul.addr %s364, 8
          %s366 = scalar_lea.vmem %s2, %s365
          %s367 = smul.u32 2, %s34
        $region20: #{tpu_custom_call.1} parent=11 // pred_fallthru
          _
        // Predicated region
        $region21: #{tpu_custom_call.1} parent=11 // pred_check
          %p368 = pneg %p215
        $region22: #{tpu_custom_call.1} parent=11 // pred_check_branch
          %370 = sbr.rel (%p368) target = $region24
        $region23: #{tpu_custom_call.1} parent=11 // pred_region
          _
        $region24: #{tpu_custom_call.1} parent=11 // pred_fallthru
          _
        // Predicated region
        $region25: #{tpu_custom_call.1} parent=11 // pred_check
          %p371 = pneg %p236
        $region26: #{tpu_custom_call.1} parent=11 // pred_check_branch
          %373 = sbr.rel (%p371) target = $region28
        $region27: #{tpu_custom_call.1} parent=11 // pred_region
          _
        $region28: #{tpu_custom_call.1} parent=11 // pred_fallthru
          _
        // Predicated region
        $region29: #{tpu_custom_call.1} parent=11 // pred_check
          %p374 = pneg %p257
        $region30: #{tpu_custom_call.1} parent=11 // pred_check_branch
          %376 = sbr.rel (%p374) target = $region32
        $region31: #{tpu_custom_call.1} parent=11 // pred_region
          _
        $region32: #{tpu_custom_call.1} parent=11 // pred_fallthru
          _
      $region12: #{tpu_custom_call.1} parent=5 // pred_fallthru
        _
      %p377 = scmp.lt.s32.totalorder %s24, 2
      // Predicated region
      $region33: #{tpu_custom_call.1} parent=5 // pred_check
        %p378 = pneg %p377
      $region34: #{tpu_custom_call.1} parent=5 // pred_check_branch
        %380 = sbr.rel (%p378) target = $region36
      $region35: #{tpu_custom_call.1} parent=5 // pred_region
        // Predicated region
        $region37: #{tpu_custom_call.1} parent=35 // pred_check
          %p381 = pneg %p82
        $region38: #{tpu_custom_call.1} parent=35 // pred_check_branch
          %383 = sbr.rel (%p381) target = $region40
        $region39: #{tpu_custom_call.1} parent=35 // pred_region
          %p384 = scmp.lt.s32.totalorder %s31, 1
          %s385 = scalar_select %p384, %s31, 1
          %s386 = smul.addr %s385, 8
          %s387 = scalar_lea.vmem %s1, %s386
        $region40: #{tpu_custom_call.1} parent=35 // pred_fallthru
          _
        // Predicated region
        $region41: #{tpu_custom_call.1} parent=35 // pred_check
          %p388 = pneg %p134
        $region42: #{tpu_custom_call.1} parent=35 // pred_check_branch
          %390 = sbr.rel (%p388) target = $region44
        $region43: #{tpu_custom_call.1} parent=35 // pred_region
          %p391 = scmp.lt.s32.totalorder %s31, 1
          %s392 = scalar_select %p391, %s31, 1
          %s393 = smul.addr %s392, 8
          %s394 = scalar_lea.vmem %s3, %s393
        $region44: #{tpu_custom_call.1} parent=35 // pred_fallthru
          _
        // Predicated region
        $region45: #{tpu_custom_call.1} parent=35 // pred_check
          %p395 = pneg %p160
        $region46: #{tpu_custom_call.1} parent=35 // pred_check_branch
          %397 = sbr.rel (%p395) target = $region48
        $region47: #{tpu_custom_call.1} parent=35 // pred_region
          %p398 = scmp.lt.s32.totalorder %s31, 1
          %s399 = scalar_select %p398, %s31, 1
          %s400 = smul.addr %s399, 8
          %s401 = scalar_lea.vmem %s4, %s400
        $region48: #{tpu_custom_call.1} parent=35 // pred_fallthru
          _
        // Predicated region
        $region49: #{tpu_custom_call.1} parent=35 // pred_check
          %p402 = pneg %p188
        $region50: #{tpu_custom_call.1} parent=35 // pred_check_branch
          %404 = sbr.rel (%p402) target = $region52
        $region51: #{tpu_custom_call.1} parent=35 // pred_region
          %p405 = scmp.lt.s32.totalorder %s31, 1
          %s406 = scalar_select %p405, %s31, 1
          %p407 = scmp.lt.s32.totalorder %s32, 0
          %s408 = scalar_select %p407, %s32, 0
          %s409 = sadd.s32 %s408, %s406
          %s410 = smul.addr %s409, 8
          %s411 = scalar_lea.vmem %s5, %s410
        $region52: #{tpu_custom_call.1} parent=35 // pred_fallthru
          _
      $region36: #{tpu_custom_call.1} parent=5 // pred_fallthru
        _
      %p412 = scmp.le.s32.totalorder 1, %s24
      %p413 = scmp.lt.s32.totalorder %s24, 3
      %p414 = pnand %p412, %p413
      %p415 = pneg %p414
      // Predicated region
      $region53: #{tpu_custom_call.1} parent=5 // pred_check
        _
      $region54: #{tpu_custom_call.1} parent=5 // pred_check_branch
        %417 = sbr.rel (%p414) target = $region56
      $region55: #{tpu_custom_call.1} parent=5 // pred_region
        %s418 = ssub.s32 %s24, 1
        %s419 = smul.u32 2, %s34
        %p420 = scmp.lt.s32.totalorder %s419, 1
        %s421 = scalar_select %p420, %s419, 1
        %s422 = smul.addr %s421, 8
        %s423 = scalar_lea.vmem %s0, %s422
        %p424 = pneg %p62
        %p425 = pneg %p59
        %p426 = scmp.lt.s32.totalorder %s33, 1
        %s427 = scalar_select %p426, %s33, 1
        %s428 = smul.addr %s427, 8
        %s429 = scalar_lea.vmem %s1, %s428
        %p430 = pneg %p88
        %p431 = pneg %p85
        %s432 = smul.u32 2, %s34
        %p433 = scmp.lt.s32.totalorder %s432, 1
        %s434 = scalar_select %p433, %s432, 1
        %s435 = smul.addr %s434, 8
        %s436 = scalar_lea.vmem %s2, %s435
        %p437 = pneg %p114
        %p438 = pneg %p111
        %p439 = scmp.lt.s32.totalorder %s33, 1
        %s440 = scalar_select %p439, %s33, 1
        %s441 = smul.addr %s440, 8
        %s442 = scalar_lea.vmem %s3, %s441
        %p443 = pneg %p140
        %p444 = pneg %p137
        %p445 = scmp.lt.s32.totalorder %s33, 1
        %s446 = scalar_select %p445, %s33, 1
        %s447 = smul.addr %s446, 8
        %s448 = scalar_lea.vmem %s4, %s447
        %p449 = pneg %p166
        %p450 = pneg %p163
        %p451 = scmp.lt.s32.totalorder %s33, 1
        %s452 = scalar_select %p451, %s33, 1
        %p453 = scmp.lt.s32.totalorder %s34, 0
        %s454 = scalar_select %p453, %s34, 0
        %s455 = sadd.s32 %s454, %s452
        %s456 = smul.addr %s455, 8
        %s457 = scalar_lea.vmem %s5, %s456
        %p458 = pneg %p194
        %p459 = pneg %p191
        %p460 = pneg %p215
        %p461 = pneg %p212
        %p462 = pneg %p236
        %p463 = pneg %p233
        %p464 = pneg %p257
        %p465 = pneg %p254
        %p466 = pneg %p283
        %p467 = pneg %p280
        %p468 = scmp.lt.s32.totalorder %s33, 1
        %s469 = scalar_select %p468, %s33, 1
        %s470 = smul.addr %s469, 8
        %s471 = scalar_lea.vmem %s9, %s470
        %p472 = pneg %p309
        %p473 = pneg %p306
        %s474 = sand.u32 %s296, 1
        %s475 = scalar_lea.sflag [#allocation4], %s474
        %s476 = sand.u32 %s296, 1
        %s477 = scalar_lea.vmem [#allocation3], %s476
        %p478 = pneg %p335
        %p479 = pneg %p332
        %s480 = sand.u32 %s322, 1
        %s481 = scalar_lea.sflag [#allocation6], %s480
        %s482 = sand.u32 %s322, 1
        %s483 = scalar_lea.vmem [#allocation5], %s482
        %s484 = smul.u32 2, %s34
        %p485 = scmp.lt.s32.totalorder %s484, 1
        %s486 = scalar_select %p485, %s484, 1
        %s487 = smul.addr %s486, 8
        %s488 = scalar_lea.vmem %s0, %s487
        %s489 = smul.u32 2, %s34
        %p490 = scmp.lt.s32.totalorder %s33, 1
        %s491 = scalar_select %p490, %s33, 1
        %s492 = smul.addr %s491, 8
        %s493 = scalar_lea.vmem %s1, %s492
        %s494 = smul.u32 2, %s34
        %p495 = scmp.lt.s32.totalorder %s494, 1
        %s496 = scalar_select %p495, %s494, 1
        %s497 = smul.addr %s496, 8
        %s498 = scalar_lea.vmem %s2, %s497
        %s499 = smul.u32 2, %s34
        %p500 = scmp.lt.s32.totalorder %s33, 1
        %s501 = scalar_select %p500, %s33, 1
        %s502 = smul.addr %s501, 8
        %s503 = scalar_lea.vmem %s3, %s502
        %p504 = scmp.lt.s32.totalorder %s33, 1
        %s505 = scalar_select %p504, %s33, 1
        %s506 = smul.addr %s505, 8
        %s507 = scalar_lea.vmem %s4, %s506
        %p508 = scmp.lt.s32.totalorder %s33, 1
        %s509 = scalar_select %p508, %s33, 1
        %p510 = scmp.lt.s32.totalorder %s34, 0
        %s511 = scalar_select %p510, %s34, 0
        %s512 = sadd.s32 %s511, %s509
        %s513 = smul.addr %s512, 8
        %s514 = scalar_lea.vmem %s5, %s513
        %p515 = scmp.lt.s32.totalorder %s33, 1
        %s516 = scalar_select %p515, %s33, 1
        %s517 = smul.addr %s516, 8
        %s518 = scalar_lea.vmem %s9, %s517
        %p519 = scmp.eq.s32.totalorder %s34, 0
        // Predicated region
        $region57: #{tpu_custom_call.1} parent=55 // pred_check
          %p520 = pneg %p519
        $region58: #{tpu_custom_call.1} parent=55 // pred_check_branch
          %522 = sbr.rel (%p520) target = $region60
        $region59: #{tpu_custom_call.1} parent=55 // pred_region
          %vm523 = vcmask 64512
          %524 = vst.msk [vmem:[#allocation2] sm:$0xff] %vm523, 0.0
          %525 = vst.msk [vmem:[#allocation2 + $0x8] sm:$0xff] %vm523, 0.0
        $region60: #{tpu_custom_call.1} parent=55 // pred_fallthru
          _
        %v526 = vld [vmem:[%s514] sm:$0xff]
        %v527 = vld [vmem:[%s488] sm:$0xff]
        %v528 = vld [vmem:[%s488 + $0x8] sm:$0xff]
        %v529 = vld [vmem:[%s498] sm:$0xff]
        %v530 = vld [vmem:[%s498 + $0x8] sm:$0xff]
        %532 = vset.pattern.permute.xlu0 0
        %533 = vperm.xlu0 %532, %v529
        %v534 = vpop.permute.xlu0 %533
        %537 = vset.pattern.permute.xlu0 0
        %538 = vperm.xlu0 %537, %v530
        %v539 = vpop.permute.xlu0 %538
        %v541 = vmul.f32 %v527, %v534
        %v542 = vmul.f32 %v528, %v539
        %v543 = vld [vmem:[#allocation2] sm:$0xff]
        %vm544 = vcmask 130048
        %v546 = vsel %vm544, %v526, 0
        %548 = vmatprep.subr.mxu0 0.0
        %549 = vmatpush1.msra.mxu0 %v541
        %550 = vmatprep.subr.mxu0 0.0
        %551 = vmatpush1.msra.mxu0 %v542
        %552 = vmatprep.subr.mxu0 0.0
        %553 = vmatpush1.msra.mxu0 0.0
        %554 = vmatprep.subr.mxu0 0.0
        %555 = vmatpush1.msra.mxu0 0.0
        %556 = vmatprep.subr.mxu0 0.0
        %557 = vmatpush1.msra.mxu0 0.0
        %558 = vmatprep.subr.mxu0 0.0
        %559 = vmatpush1.msra.mxu0 0.0
        %560 = vmatprep.subr.mxu0 0.0
        %561 = vmatpush1.msra.mxu0 0.0
        %562 = vmatprep.subr.mxu0 0.0
        %563 = vmatpush1.msra.mxu0 0.0
        %564 = vmatprep.subr.mxu0 0.0
        %565 = vmatpush1.msra.mxu0 0.0
        %566 = vmatprep.subr.mxu0 0.0
        %567 = vmatpush1.msra.mxu0 0.0
        %568 = vmatprep.subr.mxu0 0.0
        %569 = vmatpush1.msra.mxu0 0.0
        %570 = vmatprep.subr.mxu0 0.0
        %571 = vmatpush1.msra.mxu0 0.0
        %572 = vmatprep.subr.mxu0 0.0
        %573 = vmatpush1.msra.mxu0 0.0
        %574 = vmatprep.subr.mxu0 0.0
        %575 = vmatpush1.msra.mxu0 0.0
        %576 = vmatprep.subr.mxu0 0.0
        %577 = vmatpush1.msra.mxu0 0.0
        %578 = vmatprep.subr.mxu0 0.0
        %579 = vmatpush1.msra.mxu0 0.0
        %580 = vmatprep.subr.mxu0 0.0
        %581 = vmatpush1.msra.mxu0 0.0
        %582 = vmatprep.subr.mxu0 0.0
        %583 = vmatpush1.msra.mxu0 0.0
        %584 = vmatprep.subr.mxu0 0.0
        %585 = vmatpush1.msra.mxu0 0.0
        %586 = vmatprep.subr.mxu0 0.0
        %587 = vmatpush1.msra.mxu0 0.0
        %588 = vmatprep.subr.mxu0 0.0
        %589 = vmatpush1.msra.mxu0 0.0
        %590 = vmatprep.subr.mxu0 0.0
        %591 = vmatpush1.msra.mxu0 0.0
        %592 = vmatprep.subr.mxu0 0.0
        %593 = vmatpush1.msra.mxu0 0.0
        %594 = vmatprep.subr.mxu0 0.0
        %595 = vmatpush1.msra.mxu0 0.0
        %596 = vmatprep.subr.mxu0 0.0
        %597 = vmatpush1.msra.mxu0 0.0
        %598 = vmatprep.subr.mxu0 0.0
        %599 = vmatpush1.msra.mxu0 0.0
        %600 = vmatprep.subr.mxu0 0.0
        %601 = vmatpush1.msra.mxu0 0.0
        %602 = vmatprep.subr.mxu0 0.0
        %603 = vmatpush1.msra.mxu0 0.0
        %604 = vmatprep.subr.mxu0 0.0
        %605 = vmatpush1.msra.mxu0 0.0
        %606 = vmatprep.subr.mxu0 0.0
        %607 = vmatpush1.msra.mxu0 0.0
        %608 = vmatprep.subr.mxu0 0.0
        %609 = vmatpush1.msra.mxu0 0.0
        %610 = vmatprep.subr.mxu0 0.0
        %611 = vmatpush1.msra.mxu0 0.0
        %612 = vmatprep.mubr.f32.mxu0 0.0
        %613 = vmatmul.mubr.f32.gmra.mrb[0].mxu0 %v546
        %v614 = vpop.f32.mrb[0].mxu0
        %v615 = vadd.f32 0.0, %v614
        %v616 = vpop.f32.mrb[0].mxu0
        %617 = vdwg.mxu0
        %v618 = vadd.f32 %v543, %v615
        %vm619 = vcmask 64512
        %620 = vst.msk [vmem:[#allocation2] sm:$0xff] %vm619, %v618
        %621 = vset.pattern.permute.xlu0 1
        %622 = vperm.xlu0 %621, %v529
        %v623 = vpop.permute.xlu0 %622
        %625 = vset.pattern.permute.xlu0 1
        %626 = vperm.xlu0 %625, %v530
        %v627 = vpop.permute.xlu0 %626
        %v629 = vmul.f32 %v527, %v623
        %v630 = vmul.f32 %v528, %v627
        %s631 = scalar_lea.vmem [#allocation2], 8
        %v632 = vld [vmem:[%s631] sm:$0xff]
        %633 = vmatprep.subr.mxu0 0.0
        %634 = vmatpush1.msra.mxu0 %v629
        %635 = vmatprep.subr.mxu0 0.0
        %636 = vmatpush1.msra.mxu0 %v630
        %637 = vmatprep.subr.mxu0 0.0
        %638 = vmatpush1.msra.mxu0 0.0
        %639 = vmatprep.subr.mxu0 0.0
        %640 = vmatpush1.msra.mxu0 0.0
        %641 = vmatprep.subr.mxu0 0.0
        %642 = vmatpush1.msra.mxu0 0.0
        %643 = vmatprep.subr.mxu0 0.0
        %644 = vmatpush1.msra.mxu0 0.0
        %645 = vmatprep.subr.mxu0 0.0
        %646 = vmatpush1.msra.mxu0 0.0
        %647 = vmatprep.subr.mxu0 0.0
        %648 = vmatpush1.msra.mxu0 0.0
        %649 = vmatprep.subr.mxu0 0.0
        %650 = vmatpush1.msra.mxu0 0.0
        %651 = vmatprep.subr.mxu0 0.0
        %652 = vmatpush1.msra.mxu0 0.0
        %653 = vmatprep.subr.mxu0 0.0
        %654 = vmatpush1.msra.mxu0 0.0
        %655 = vmatprep.subr.mxu0 0.0
        %656 = vmatpush1.msra.mxu0 0.0
        %657 = vmatprep.subr.mxu0 0.0
        %658 = vmatpush1.msra.mxu0 0.0
        %659 = vmatprep.subr.mxu0 0.0
        %660 = vmatpush1.msra.mxu0 0.0
        %661 = vmatprep.subr.mxu0 0.0
        %662 = vmatpush1.msra.mxu0 0.0
        %663 = vmatprep.subr.mxu0 0.0
        %664 = vmatpush1.msra.mxu0 0.0
        %665 = vmatprep.subr.mxu0 0.0
        %666 = vmatpush1.msra.mxu0 0.0
        %667 = vmatprep.subr.mxu0 0.0
        %668 = vmatpush1.msra.mxu0 0.0
        %669 = vmatprep.subr.mxu0 0.0
        %670 = vmatpush1.msra.mxu0 0.0
        %671 = vmatprep.subr.mxu0 0.0
        %672 = vmatpush1.msra.mxu0 0.0
        %673 = vmatprep.subr.mxu0 0.0
        %674 = vmatpush1.msra.mxu0 0.0
        %675 = vmatprep.subr.mxu0 0.0
        %676 = vmatpush1.msra.mxu0 0.0
        %677 = vmatprep.subr.mxu0 0.0
        %678 = vmatpush1.msra.mxu0 0.0
        %679 = vmatprep.subr.mxu0 0.0
        %680 = vmatpush1.msra.mxu0 0.0
        %681 = vmatprep.subr.mxu0 0.0
        %682 = vmatpush1.msra.mxu0 0.0
        %683 = vmatprep.subr.mxu0 0.0
        %684 = vmatpush1.msra.mxu0 0.0
        %685 = vmatprep.subr.mxu0 0.0
        %686 = vmatpush1.msra.mxu0 0.0
        %687 = vmatprep.subr.mxu0 0.0
        %688 = vmatpush1.msra.mxu0 0.0
        %689 = vmatprep.subr.mxu0 0.0
        %690 = vmatpush1.msra.mxu0 0.0
        %691 = vmatprep.subr.mxu0 0.0
        %692 = vmatpush1.msra.mxu0 0.0
        %693 = vmatprep.subr.mxu0 0.0
        %694 = vmatpush1.msra.mxu0 0.0
        %695 = vmatprep.subr.mxu0 0.0
        %696 = vmatpush1.msra.mxu0 0.0
        %697 = vmatprep.mubr.f32.mxu0 0.0
        %698 = vmatmul.mubr.f32.gmra.mrb[0].mxu0 %v546
        %v699 = vpop.f32.mrb[0].mxu0
        %v700 = vadd.f32 0.0, %v699
        %v701 = vpop.f32.mrb[0].mxu0
        %702 = vdwg.mxu0
        %v703 = vadd.f32 %v632, %v700
        %704 = vst.msk [vmem:[%s631] sm:$0xff] %vm619, %v703
        // Predicated region
        $region61: #{tpu_custom_call.1} parent=55 // pred_check
          %p705 = pneg %p519
        $region62: #{tpu_custom_call.1} parent=55 // pred_check_branch
          %707 = sbr.rel (%p705) target = $region64
        $region63: #{tpu_custom_call.1} parent=55 // pred_region
          %v708 = vld [vmem:[%s493] sm:$0xff]
          %v709 = vld [vmem:[%s503] sm:$0xff]
          %v710 = vld [vmem:[%s507] sm:$0xff]
          %v711 = vld [vmem:[#allocation2] sm:$0xff]
          %713 = vset.pattern.permute.xlu0 0
          %714 = vperm.xlu0 %713, %v710
          %v715 = vpop.permute.xlu0 %714
          %v717 = vmul.f32 %v711, %v715
          %719 = vset.pattern.permute.xlu0 0
          %720 = vperm.xlu0 %719, %v709
          %v721 = vpop.permute.xlu0 %720
          %v723 = vmul.f32 %v708, %v721
          %v724 = vld [vmem:[%s6] sm:$0xff]
          %v725 = vld [vmem:[%s7] sm:$0xff]
          %v727 = vsel %vm619, %v723, 0
          %729 = vmatprep.subr.mxu0 0.0
          %730 = vmatpush1.msra.mxu0 %v725
          %731 = vmatprep.subr.mxu0 0.0
          %732 = vmatpush1.msra.mxu0 0.0
          %733 = vmatprep.subr.mxu0 0.0
          %734 = vmatpush1.msra.mxu0 0.0
          %735 = vmatprep.subr.mxu0 0.0
          %736 = vmatpush1.msra.mxu0 0.0
          %737 = vmatprep.subr.mxu0 0.0
          %738 = vmatpush1.msra.mxu0 0.0
          %739 = vmatprep.subr.mxu0 0.0
          %740 = vmatpush1.msra.mxu0 0.0
          %741 = vmatprep.subr.mxu0 0.0
          %742 = vmatpush1.msra.mxu0 0.0
          %743 = vmatprep.subr.mxu0 0.0
          %744 = vmatpush1.msra.mxu0 0.0
          %745 = vmatprep.subr.mxu0 0.0
          %746 = vmatpush1.msra.mxu0 0.0
          %747 = vmatprep.subr.mxu0 0.0
          %748 = vmatpush1.msra.mxu0 0.0
          %749 = vmatprep.subr.mxu0 0.0
          %750 = vmatpush1.msra.mxu0 0.0
          %751 = vmatprep.subr.mxu0 0.0
          %752 = vmatpush1.msra.mxu0 0.0
          %753 = vmatprep.subr.mxu0 0.0
          %754 = vmatpush1.msra.mxu0 0.0
          %755 = vmatprep.subr.mxu0 0.0
          %756 = vmatpush1.msra.mxu0 0.0
          %757 = vmatprep.subr.mxu0 0.0
          %758 = vmatpush1.msra.mxu0 0.0
          %759 = vmatprep.subr.mxu0 0.0
          %760 = vmatpush1.msra.mxu0 0.0
          %761 = vmatprep.subr.mxu0 0.0
          %762 = vmatpush1.msra.mxu0 0.0
          %763 = vmatprep.subr.mxu0 0.0
          %764 = vmatpush1.msra.mxu0 0.0
          %765 = vmatprep.subr.mxu0 0.0
          %766 = vmatpush1.msra.mxu0 0.0
          %767 = vmatprep.subr.mxu0 0.0
          %768 = vmatpush1.msra.mxu0 0.0
          %769 = vmatprep.subr.mxu0 0.0
          %770 = vmatpush1.msra.mxu0 0.0
          %771 = vmatprep.subr.mxu0 0.0
          %772 = vmatpush1.msra.mxu0 0.0
          %773 = vmatprep.subr.mxu0 0.0
          %774 = vmatpush1.msra.mxu0 0.0
          %775 = vmatprep.subr.mxu0 0.0
          %776 = vmatpush1.msra.mxu0 0.0
          %777 = vmatprep.subr.mxu0 0.0
          %778 = vmatpush1.msra.mxu0 0.0
          %779 = vmatprep.subr.mxu0 0.0
          %780 = vmatpush1.msra.mxu0 0.0
          %781 = vmatprep.subr.mxu0 0.0
          %782 = vmatpush1.msra.mxu0 0.0
          %783 = vmatprep.subr.mxu0 0.0
          %784 = vmatpush1.msra.mxu0 0.0
          %785 = vmatprep.subr.mxu0 0.0
          %786 = vmatpush1.msra.mxu0 0.0
          %787 = vmatprep.subr.mxu0 0.0
          %788 = vmatpush1.msra.mxu0 0.0
          %789 = vmatprep.subr.mxu0 0.0
          %790 = vmatpush1.msra.mxu0 0.0
          %791 = vmatprep.subr.mxu0 0.0
          %792 = vmatpush1.msra.mxu0 0.0
          %793 = vmatprep.mubr.f32.mxu0 0.0
          %794 = vmatmul.mubr.f32.gmra.mrb[0].mxu0 %v727
          %v795 = vpop.f32.mrb[0].mxu0
          %v796 = vadd.f32 0.0, %v795
          %v797 = vpop.f32.mrb[0].mxu0
          %798 = vdwg.mxu0
          %v800 = vsel %vm619, %v717, 0
          %802 = vmatprep.subr.mxu0 0.0
          %803 = vmatpush1.msra.mxu0 %v724
          %804 = vmatprep.subr.mxu0 0.0
          %805 = vmatpush1.msra.mxu0 0.0
          %806 = vmatprep.subr.mxu0 0.0
          %807 = vmatpush1.msra.mxu0 0.0
          %808 = vmatprep.subr.mxu0 0.0
          %809 = vmatpush1.msra.mxu0 0.0
          %810 = vmatprep.subr.mxu0 0.0
          %811 = vmatpush1.msra.mxu0 0.0
          %812 = vmatprep.subr.mxu0 0.0
          %813 = vmatpush1.msra.mxu0 0.0
          %814 = vmatprep.subr.mxu0 0.0
          %815 = vmatpush1.msra.mxu0 0.0
          %816 = vmatprep.subr.mxu0 0.0
          %817 = vmatpush1.msra.mxu0 0.0
          %818 = vmatprep.subr.mxu0 0.0
          %819 = vmatpush1.msra.mxu0 0.0
          %820 = vmatprep.subr.mxu0 0.0
          %821 = vmatpush1.msra.mxu0 0.0
          %822 = vmatprep.subr.mxu0 0.0
          %823 = vmatpush1.msra.mxu0 0.0
          %824 = vmatprep.subr.mxu0 0.0
          %825 = vmatpush1.msra.mxu0 0.0
          %826 = vmatprep.subr.mxu0 0.0
          %827 = vmatpush1.msra.mxu0 0.0
          %828 = vmatprep.subr.mxu0 0.0
          %829 = vmatpush1.msra.mxu0 0.0
          %830 = vmatprep.subr.mxu0 0.0
          %831 = vmatpush1.msra.mxu0 0.0
          %832 = vmatprep.subr.mxu0 0.0
          %833 = vmatpush1.msra.mxu0 0.0
          %834 = vmatprep.subr.mxu0 0.0
          %835 = vmatpush1.msra.mxu0 0.0
          %836 = vmatprep.subr.mxu0 0.0
          %837 = vmatpush1.msra.mxu0 0.0
          %838 = vmatprep.subr.mxu0 0.0
          %839 = vmatpush1.msra.mxu0 0.0
          %840 = vmatprep.subr.mxu0 0.0
          %841 = vmatpush1.msra.mxu0 0.0
          %842 = vmatprep.subr.mxu0 0.0
          %843 = vmatpush1.msra.mxu0 0.0
          %844 = vmatprep.subr.mxu0 0.0
          %845 = vmatpush1.msra.mxu0 0.0
          %846 = vmatprep.subr.mxu0 0.0
          %847 = vmatpush1.msra.mxu0 0.0
          %848 = vmatprep.subr.mxu0 0.0
          %849 = vmatpush1.msra.mxu0 0.0
          %850 = vmatprep.subr.mxu0 0.0
          %851 = vmatpush1.msra.mxu0 0.0
          %852 = vmatprep.subr.mxu0 0.0
          %853 = vmatpush1.msra.mxu0 0.0
          %854 = vmatprep.subr.mxu0 0.0
          %855 = vmatpush1.msra.mxu0 0.0
          %856 = vmatprep.subr.mxu0 0.0
          %857 = vmatpush1.msra.mxu0 0.0
          %858 = vmatprep.subr.mxu0 0.0
          %859 = vmatpush1.msra.mxu0 0.0
          %860 = vmatprep.subr.mxu0 0.0
          %861 = vmatpush1.msra.mxu0 0.0
          %862 = vmatprep.subr.mxu0 0.0
          %863 = vmatpush1.msra.mxu0 0.0
          %864 = vmatprep.subr.mxu0 0.0
          %865 = vmatpush1.msra.mxu0 0.0
          %866 = vmatprep.mubr.f32.mxu0 0.0
          %867 = vmatmul.mubr.f32.gmra.mrb[0].mxu0 %v800
          %v868 = vpop.f32.mrb[0].mxu0
          %v869 = vadd.f32 %v796, %v868
          %v870 = vpop.f32.mrb[0].mxu0
          %871 = vdwg.mxu0
          %v872 = vld [vmem:[%s8] sm:$0x1]
          %v874 = vlaneseq
          %v875 = vshrl.u32 %v874, 7
          %v876 = vsub.s32 0, %v875
          %v877 = vrot.slane %v872, %v876
          %v879 = vadd.f32 %v869, %v877
          %vm880 = vcmp.ge.f32.partialorder %v879, 0.0
          %v881 = vmul.f32 %v879, 0.01
          %v882 = vsel %vm880, %v879, %v881
          %v883 = vmul.f32 %v882, %v715
          %vm884 = vcmask 31744
          %885 = vst.msk [vmem:[%s518] sm:$0xff] %vm884, %v883
          %v886 = vld [vmem:[%s631] sm:$0xff]
          %887 = vset.pattern.permute.xlu0 1
          %888 = vperm.xlu0 %887, %v710
          %v889 = vpop.permute.xlu0 %888
          %v891 = vmul.f32 %v886, %v889
          %892 = vset.pattern.permute.xlu0 1
          %893 = vperm.xlu0 %892, %v709
          %v894 = vpop.permute.xlu0 %893
          %v896 = vmul.f32 %v708, %v894
          %s897 = scalar_lea.vmem %s6, 8
          %v898 = vld [vmem:[%s897] sm:$0xff]
          %s899 = scalar_lea.vmem %s7, 8
          %v900 = vld [vmem:[%s899] sm:$0xff]
          %v902 = vsel %vm619, %v896, 0
          %904 = vmatprep.subr.mxu0 0.0
          %905 = vmatpush1.msra.mxu0 %v900
          %906 = vmatprep.subr.mxu0 0.0
          %907 = vmatpush1.msra.mxu0 0.0
          %908 = vmatprep.subr.mxu0 0.0
          %909 = vmatpush1.msra.mxu0 0.0
          %910 = vmatprep.subr.mxu0 0.0
          %911 = vmatpush1.msra.mxu0 0.0
          %912 = vmatprep.subr.mxu0 0.0
          %913 = vmatpush1.msra.mxu0 0.0
          %914 = vmatprep.subr.mxu0 0.0
          %915 = vmatpush1.msra.mxu0 0.0
          %916 = vmatprep.subr.mxu0 0.0
          %917 = vmatpush1.msra.mxu0 0.0
          %918 = vmatprep.subr.mxu0 0.0
          %919 = vmatpush1.msra.mxu0 0.0
          %920 = vmatprep.subr.mxu0 0.0
          %921 = vmatpush1.msra.mxu0 0.0
          %922 = vmatprep.subr.mxu0 0.0
          %923 = vmatpush1.msra.mxu0 0.0
          %924 = vmatprep.subr.mxu0 0.0
          %925 = vmatpush1.msra.mxu0 0.0
          %926 = vmatprep.subr.mxu0 0.0
          %927 = vmatpush1.msra.mxu0 0.0
          %928 = vmatprep.subr.mxu0 0.0
          %929 = vmatpush1.msra.mxu0 0.0
          %930 = vmatprep.subr.mxu0 0.0
          %931 = vmatpush1.msra.mxu0 0.0
          %932 = vmatprep.subr.mxu0 0.0
          %933 = vmatpush1.msra.mxu0 0.0
          %934 = vmatprep.subr.mxu0 0.0
          %935 = vmatpush1.msra.mxu0 0.0
          %936 = vmatprep.subr.mxu0 0.0
          %937 = vmatpush1.msra.mxu0 0.0
          %938 = vmatprep.subr.mxu0 0.0
          %939 = vmatpush1.msra.mxu0 0.0
          %940 = vmatprep.subr.mxu0 0.0
          %941 = vmatpush1.msra.mxu0 0.0
          %942 = vmatprep.subr.mxu0 0.0
          %943 = vmatpush1.msra.mxu0 0.0
          %944 = vmatprep.subr.mxu0 0.0
          %945 = vmatpush1.msra.mxu0 0.0
          %946 = vmatprep.subr.mxu0 0.0
          %947 = vmatpush1.msra.mxu0 0.0
          %948 = vmatprep.subr.mxu0 0.0
          %949 = vmatpush1.msra.mxu0 0.0
          %950 = vmatprep.subr.mxu0 0.0
          %951 = vmatpush1.msra.mxu0 0.0
          %952 = vmatprep.subr.mxu0 0.0
          %953 = vmatpush1.msra.mxu0 0.0
          %954 = vmatprep.subr.mxu0 0.0
          %955 = vmatpush1.msra.mxu0 0.0
          %956 = vmatprep.subr.mxu0 0.0
          %957 = vmatpush1.msra.mxu0 0.0
          %958 = vmatprep.subr.mxu0 0.0
          %959 = vmatpush1.msra.mxu0 0.0
          %960 = vmatprep.subr.mxu0 0.0
          %961 = vmatpush1.msra.mxu0 0.0
          %962 = vmatprep.subr.mxu0 0.0
          %963 = vmatpush1.msra.mxu0 0.0
          %964 = vmatprep.subr.mxu0 0.0
          %965 = vmatpush1.msra.mxu0 0.0
          %966 = vmatprep.subr.mxu0 0.0
          %967 = vmatpush1.msra.mxu0 0.0
          %968 = vmatprep.mubr.f32.mxu0 0.0
          %969 = vmatmul.mubr.f32.gmra.mrb[0].mxu0 %v902
          %v970 = vpop.f32.mrb[0].mxu0
          %v971 = vadd.f32 0.0, %v970
          %v972 = vpop.f32.mrb[0].mxu0
          %973 = vdwg.mxu0
          %v975 = vsel %vm619, %v891, 0
          %977 = vmatprep.subr.mxu0 0.0
          %978 = vmatpush1.msra.mxu0 %v898
          %979 = vmatprep.subr.mxu0 0.0
          %980 = vmatpush1.msra.mxu0 0.0
          %981 = vmatprep.subr.mxu0 0.0
          %982 = vmatpush1.msra.mxu0 0.0
          %983 = vmatprep.subr.mxu0 0.0
          %984 = vmatpush1.msra.mxu0 0.0
          %985 = vmatprep.subr.mxu0 0.0
          %986 = vmatpush1.msra.mxu0 0.0
          %987 = vmatprep.subr.mxu0 0.0
          %988 = vmatpush1.msra.mxu0 0.0
          %989 = vmatprep.subr.mxu0 0.0
          %990 = vmatpush1.msra.mxu0 0.0
          %991 = vmatprep.subr.mxu0 0.0
          %992 = vmatpush1.msra.mxu0 0.0
          %993 = vmatprep.subr.mxu0 0.0
          %994 = vmatpush1.msra.mxu0 0.0
          %995 = vmatprep.subr.mxu0 0.0
          %996 = vmatpush1.msra.mxu0 0.0
          %997 = vmatprep.subr.mxu0 0.0
          %998 = vmatpush1.msra.mxu0 0.0
          %999 = vmatprep.subr.mxu0 0.0
          %1000 = vmatpush1.msra.mxu0 0.0
          %1001 = vmatprep.subr.mxu0 0.0
          %1002 = vmatpush1.msra.mxu0 0.0
          %1003 = vmatprep.subr.mxu0 0.0
          %1004 = vmatpush1.msra.mxu0 0.0
          %1005 = vmatprep.subr.mxu0 0.0
          %1006 = vmatpush1.msra.mxu0 0.0
          %1007 = vmatprep.subr.mxu0 0.0
          %1008 = vmatpush1.msra.mxu0 0.0
          %1009 = vmatprep.subr.mxu0 0.0
          %1010 = vmatpush1.msra.mxu0 0.0
          %1011 = vmatprep.subr.mxu0 0.0
          %1012 = vmatpush1.msra.mxu0 0.0
          %1013 = vmatprep.subr.mxu0 0.0
          %1014 = vmatpush1.msra.mxu0 0.0
          %1015 = vmatprep.subr.mxu0 0.0
          %1016 = vmatpush1.msra.mxu0 0.0
          %1017 = vmatprep.subr.mxu0 0.0
          %1018 = vmatpush1.msra.mxu0 0.0
          %1019 = vmatprep.subr.mxu0 0.0
          %1020 = vmatpush1.msra.mxu0 0.0
          %1021 = vmatprep.subr.mxu0 0.0
          %1022 = vmatpush1.msra.mxu0 0.0
          %1023 = vmatprep.subr.mxu0 0.0
          %1024 = vmatpush1.msra.mxu0 0.0
          %1025 = vmatprep.subr.mxu0 0.0
          %1026 = vmatpush1.msra.mxu0 0.0
          %1027 = vmatprep.subr.mxu0 0.0
          %1028 = vmatpush1.msra.mxu0 0.0
          %1029 = vmatprep.subr.mxu0 0.0
          %1030 = vmatpush1.msra.mxu0 0.0
          %1031 = vmatprep.subr.mxu0 0.0
          %1032 = vmatpush1.msra.mxu0 0.0
          %1033 = vmatprep.subr.mxu0 0.0
          %1034 = vmatpush1.msra.mxu0 0.0
          %1035 = vmatprep.subr.mxu0 0.0
          %1036 = vmatpush1.msra.mxu0 0.0
          %1037 = vmatprep.subr.mxu0 0.0
          %1038 = vmatpush1.msra.mxu0 0.0
          %1039 = vmatprep.subr.mxu0 0.0
          %1040 = vmatpush1.msra.mxu0 0.0
          %1041 = vmatprep.mubr.f32.mxu0 0.0
          %1042 = vmatmul.mubr.f32.gmra.mrb[0].mxu0 %v975
          %v1043 = vpop.f32.mrb[0].mxu0
          %v1044 = vadd.f32 %v971, %v1043
          %v1045 = vpop.f32.mrb[0].mxu0
          %1046 = vdwg.mxu0
          %s1047 = scalar_lea.vmem %s8, 1
          %v1048 = vld [vmem:[%s1047] sm:$0x1]
          %v1050 = vlaneseq
          %v1051 = vshrl.u32 %v1050, 7
          %v1052 = vsub.s32 0, %v1051
          %v1053 = vrot.slane %v1048, %v1052
          %v1055 = vadd.f32 %v1044, %v1053
          %vm1056 = vcmp.ge.f32.partialorder %v1055, 0.0
          %v1057 = vmul.f32 %v1055, 0.01
          %v1058 = vsel %vm1056, %v1055, %v1057
          %v1059 = vmul.f32 %v1058, %v889
          %1061 = vrot.lane.b32.xlu0 %v1059, 4
          %v1062 = vpop.permute.xlu0 %1061
          %vm1064 = vcmask 64544
          %1065 = vst.msk [vmem:[%s518] sm:$0xff] %vm1064, %v1062
          %v1066 = vld [vmem:[%s518] sm:$0xff]
          %v1067 = vsel %vm619, %v1066, 0.0
          %v1068 = vrot.slane %v1067, 4
          %v1069 = vadd.f32 %v1067, %v1068
          %v1070 = vrot.slane %v1069, 2
          %v1071 = vadd.f32 %v1069, %v1070
          %v1072 = vrot.slane %v1071, 1
          %v1073 = vadd.f32 %v1071, %v1072
          %vm1074 = vcmask 57344
          %1075 = vst.msk [vmem:[%s477] sm:$0x1] %vm1074, %v1073
          %v1076 = vmul.f32 %v1066, %v1066
          %v1077 = vsel %vm619, %v1076, 0.0
          %v1078 = vrot.slane %v1077, 4
          %v1079 = vadd.f32 %v1077, %v1078
          %v1080 = vrot.slane %v1079, 2
          %v1081 = vadd.f32 %v1079, %v1080
          %v1082 = vrot.slane %v1081, 1
          %v1083 = vadd.f32 %v1081, %v1082
          %1084 = vst.msk [vmem:[%s483] sm:$0x1] %vm1074, %v1083
        $region64: #{tpu_custom_call.1} parent=55 // pred_fallthru
          _
        %p1085 = scmp.lt.s32.totalorder %s33, 1
        %s1086 = scalar_select %p1085, %s33, 1
        %s1087 = smul.addr %s1086, 8
        %s1088 = scalar_lea.vmem %s9, %s1087
        %s1089 = sand.u32 %s296, 1
        %s1090 = scalar_lea.sflag [#allocation4], %s1089
        %s1091 = sand.u32 %s296, 1
        %s1092 = scalar_lea.vmem [#allocation3], %s1091
        %s1093 = sand.u32 %s322, 1
        %s1094 = scalar_lea.sflag [#allocation6], %s1093
        %s1095 = sand.u32 %s322, 1
        %s1096 = scalar_lea.vmem [#allocation5], %s1095
        // Predicated region
        $region65: #{tpu_custom_call.1} parent=55 // pred_check
          %p1097 = pneg %p280
        $region66: #{tpu_custom_call.1} parent=55 // pred_check_branch
          %1099 = sbr.rel (%p1097) target = $region68
        $region67: #{tpu_custom_call.1} parent=55 // pred_region
          _
        $region68: #{tpu_custom_call.1} parent=55 // pred_fallthru
          _
        // Predicated region
        $region69: #{tpu_custom_call.1} parent=55 // pred_check
          %p1100 = pneg %p306
        $region70: #{tpu_custom_call.1} parent=55 // pred_check_branch
          %1102 = sbr.rel (%p1100) target = $region72
        $region71: #{tpu_custom_call.1} parent=55 // pred_region
          %s1104 = ssub.s32 16, 16
          %1105 = vsyncadd %s1090, %s1104
          %s1106 = smul.addr %s33, 16
          %s1107 = scalar_lea.hbm %s10, %s1106
          %s1109 = sshll.u32 %s1092, 4
          %s1110 = int_to_ptr.vmem [resolvable:$true] %s1109
          %1112 = dma.vmem_to_hbm [thread:$0]  %s1110, 16, %s1107, %s1090
        $region72: #{tpu_custom_call.1} parent=55 // pred_fallthru
          _
        // Predicated region
        $region73: #{tpu_custom_call.1} parent=55 // pred_check
          %p1113 = pneg %p332
        $region74: #{tpu_custom_call.1} parent=55 // pred_check_branch
          %1115 = sbr.rel (%p1113) target = $region76
        $region75: #{tpu_custom_call.1} parent=55 // pred_region
          %s1117 = ssub.s32 16, 16
          %1118 = vsyncadd %s1094, %s1117
          %s1119 = smul.addr %s33, 16
          %s1120 = scalar_lea.hbm %s11, %s1119
          %s1122 = sshll.u32 %s1096, 4
          %s1123 = int_to_ptr.vmem [resolvable:$true] %s1122
          %1125 = dma.vmem_to_hbm [thread:$0]  %s1123, 16, %s1120, %s1094
        $region76: #{tpu_custom_call.1} parent=55 // pred_fallthru
          _
      $region56: #{tpu_custom_call.1} parent=5 // pred_fallthru
        _
      %p1126 = scmp.le.s32.totalorder 2, %s24
      // Predicated region
      $region77: #{tpu_custom_call.1} parent=5 // pred_check
        %p1127 = pneg %p1126
      $region78: #{tpu_custom_call.1} parent=5 // pred_check_branch
        %1129 = sbr.rel (%p1127) target = $region80
      $region79: #{tpu_custom_call.1} parent=5 // pred_region
        %s1130 = ssub.s32 %s24, 2
        // Predicated region
        $region81: #{tpu_custom_call.1} parent=79 // pred_check
          %p1131 = pneg %p286
        $region82: #{tpu_custom_call.1} parent=79 // pred_check_branch
          %1133 = sbr.rel (%p1131) target = $region84
        $region83: #{tpu_custom_call.1} parent=79 // pred_region
          %p1134 = scmp.lt.s32.totalorder %s35, 1
          %s1135 = scalar_select %p1134, %s35, 1
          %s1136 = smul.addr %s1135, 8
          %s1137 = scalar_lea.vmem %s9, %s1136
        $region84: #{tpu_custom_call.1} parent=79 // pred_fallthru
          _
        // Predicated region
        $region85: #{tpu_custom_call.1} parent=79 // pred_check
          %p1138 = pneg %p312
        $region86: #{tpu_custom_call.1} parent=79 // pred_check_branch
          %1140 = sbr.rel (%p1138) target = $region88
        $region87: #{tpu_custom_call.1} parent=79 // pred_region
          %s1141 = sand.u32 %s297, 1
          %s1142 = scalar_lea.sflag [#allocation4], %s1141
          %s1143 = sand.u32 %s297, 1
          %s1144 = scalar_lea.vmem [#allocation3], %s1143
          %1145 = dma.done %s1142, 16
        $region88: #{tpu_custom_call.1} parent=79 // pred_fallthru
          _
        // Predicated region
        $region89: #{tpu_custom_call.1} parent=79 // pred_check
          %p1146 = pneg %p338
        $region90: #{tpu_custom_call.1} parent=79 // pred_check_branch
          %1148 = sbr.rel (%p1146) target = $region92
        $region91: #{tpu_custom_call.1} parent=79 // pred_region
          %s1149 = sand.u32 %s323, 1
          %s1150 = scalar_lea.sflag [#allocation6], %s1149
          %s1151 = sand.u32 %s323, 1
          %s1152 = scalar_lea.vmem [#allocation5], %s1151
          %1153 = dma.done %s1150, 16
        $region92: #{tpu_custom_call.1} parent=79 // pred_fallthru
          _
      $region80: #{tpu_custom_call.1} parent=5 // pred_fallthru
        _
    $region6: #{tpu_custom_call.1} parent=1 // loop_footer
      %s28 = sadd.s32 1, %s24
    $region7: #{tpu_custom_call.1} parent=1 // loop_footer_branch
      %23 = sbr.rel target = $region3
    $region8: #{tpu_custom_call.1} parent=1 // loop_exit
      _
    %1154 = vsyncpa [#allocation4], 1
    %s1155 = scalar_lea.sflag [#allocation4], 1
    %1156 = vsyncpa %s1155, 1
    %1157 = vsyncpa [#allocation6], 1
    %s1158 = scalar_lea.sflag [#allocation6], 1
    %1159 = vsyncpa %s1158, 1

</llo_original>
